<compile_context>
chip_gen: v7x
topology: tpu7x:2x2x1
jax: 0.10.0
libtpu: 0.0.40
codegen_flags: <defaults>
</compile_context>

<pallas_src>
import functools

import jax
import jax.numpy as jnp
from jax.experimental import pallas as pl
from jax.experimental.pallas import tpu as pltpu

LANES = 128


def _cpe_kernel(w_ref, b_ref, xp_ref, o_ref, *, D, H, W, K):
    # w_ref : VMEM (K^3, Cb)               depthwise weights (+1 on centre tap)
    # b_ref : VMEM (1, Cb)                 bias
    # xp_ref: VMEM (D+2P, H+2P, W+2P, Cb)  zero-padded input block (chan-last)
    # o_ref : VMEM (D, H, W, Cb)           output block
    Cb = o_ref.shape[-1]
    b_vec = b_ref[...].astype(jnp.float32).reshape(1, 1, Cb)    # hoisted

    # One output depth row at a time: bounds live vregs to one (H, W, Cb)
    # f32 accumulator plus the current input slab and its shifted views.
    @pl.loop(0, D)
    def _(d):
        acc = jnp.zeros((H, W, Cb), jnp.float32)
        for kd in range(K):                       # K is small & static
            # One VMEM load + one f32 up-convert per input depth slab
            # (instead of one per tap).
            slab = xp_ref[d + kd].astype(jnp.float32)           # (Hp, Wp, Cb)
            # Hoist the sublane (W-axis) realignment out of the 9-tap loop:
            # only K-1 of these slices are tile-misaligned, paid once per kd.
            shifted = [slab[:, kw:kw + W, :] for kw in range(K)]
            for kh in range(K):
                for kw in range(K):
                    wv = w_ref[kd * K * K + kh * K + kw, :]
                    wv = wv.astype(jnp.float32).reshape(1, 1, Cb)
                    # kh slice is on a leading dim -> free vreg selection.
                    acc = acc + wv * shifted[kw][kh:kh + H]
        o_ref[d] = (acc + b_vec).astype(o_ref.dtype)


def conditional_position_encoding(x, weight, bias, kernel_size):
    """Depthwise Conv3d(k, stride=1, pad=k//2, groups=C) + bias + residual.

    x      : (N, C, D, H, W)
    weight : (C, 1, K, K, K)   (PyTorch depthwise Conv3d weight layout)
    bias   : (C,)
    """
    N, C, D, H, W = x.shape
    K = int(kernel_size)
    assert K % 2 == 1, "CPE residual add requires odd kernel_size"
    P = K // 2
    Dp, Hp, Wp = D + 2 * P, H + 2 * P, W + 2 * P
    KK = K * K * K

    # Lane density: pad channels to a multiple of the 128-lane width.
    Cpad = ((C + LANES - 1) // LANES) * LANES
    num_cb = Cpad // LANES

    # Fold the residual into the centre tap:  conv(w)(x) + x = conv(w + e)(x).
    w_flat = weight.reshape(C, KK).astype(jnp.float32)
    center = (P * K + P) * K + P
    w_flat = w_flat.at[:, center].add(1.0)
    w_cl = jnp.pad(w_flat.T, ((0, 0), (0, Cpad - C)))            # (K^3, Cpad)
    b_cl = jnp.pad(bias.astype(jnp.float32), (0, Cpad - C)).reshape(1, Cpad)

    # Layout plumbing (one fused XLA op): channels-last + channel pad +
    # spatial halo pad.  Keeping the halo in HBM removes the padded VMEM
    # scratch, the per-step zeroing and the VMEM->VMEM interior copy of v2.
    x_cl = jnp.transpose(x, (0, 2, 3, 4, 1))                     # (N,D,H,W,C)
    xp = jnp.pad(x_cl, ((0, 0), (P, P), (P, P), (P, P), (0, Cpad - C)))

    kernel = functools.partial(_cpe_kernel, D=D, H=H, W=W, K=K)

    # VMEM budget: double-buffered padded-in / out blocks + weights + slack,
    # capped by the per-generation VMEM capacity (not a hard 64 MiB clamp).
    itemsize = jnp.dtype(x.dtype).itemsize
    need = 2 * (Dp * Hp * Wp + D * H * W) * LANES * itemsize
    need += 2 * (KK + 1) * LANES * 4 + (8 << 20)
    try:
        cap = pltpu.get_tpu_info().vmem_capacity_bytes   # 128 MiB v5e/v6e, 64 MiB v7x
    except Exception:
        cap = 64 << 20
    vmem_limit = int(min(max(need, 32 << 20), cap - (4 << 20)))
    # TODO(synk): for volumes where a full (D, H, W, 128) block no longer fits
    # the per-generation VMEM cap (notably v7x's 64 MiB), add a "parallel"
    # grid axis over D with manual halo DMA (memory_space=pl.ANY); that axis
    # also guarantees >= 2 parallel grid steps for v7x's two TensorCores when
    # N * num_cb is small.

    out_cl = pl.pallas_call(
        kernel,
        out_shape=jax.ShapeDtypeStruct((N, D, H, W, Cpad), x.dtype),
        grid=(N, num_cb),
        in_specs=[
            pl.BlockSpec((KK, LANES), lambda n, cb: (0, cb)),
            pl.BlockSpec((1, LANES), lambda n, cb: (0, cb)),
            pl.BlockSpec((None, Dp, Hp, Wp, LANES),
                         lambda n, cb: (n, 0, 0, 0, cb)),
        ],
        out_specs=pl.BlockSpec((None, D, H, W, LANES),
                               lambda n, cb: (n, 0, 0, 0, cb)),
        compiler_params=pltpu.CompilerParams(
            dimension_semantics=("parallel", "parallel"),
            vmem_limit_bytes=vmem_limit,
        ),
    )(w_cl, b_cl, xp)

    return jnp.transpose(out_cl[..., :C], (0, 4, 1, 2, 3))       # back to NCDHW


if __name__ == "__main__":
    # Small shapes consistent with a 5-D Conv3d input (NCDHW).
    N, C, D, H, W = 2, 4, 8, 8, 8
    K = 3  # kernel_size

    key = jax.random.PRNGKey(0)
    kx, kwt, kb = jax.random.split(key, 3)
    x = jax.random.normal(kx, (N, C, D, H, W), dtype=jnp.float32)
    # Depthwise Conv3d weight: (out_ch=C, in_ch/groups=1, K, K, K); bias: (C,)
    weight = jax.random.normal(kwt, (C, 1, K, K, K), dtype=jnp.float32) * 0.1
    bias = jax.random.normal(kb, (C,), dtype=jnp.float32) * 0.1

    out = conditional_position_encoding(x, weight, bias, K)
    out = jax.block_until_ready(out)

    # Pure-JAX reference (same semantics as nn.Conv3d(..., groups=C) + x).
    P = K // 2
    ref = (
        jax.lax.conv_general_dilated(
            x,
            weight,
            window_strides=(1, 1, 1),
            padding=[(P, P)] * 3,
            dimension_numbers=("NCDHW", "OIDHW", "NCDHW"),
            feature_group_count=C,
        )
        + bias.reshape(1, C, 1, 1, 1)
        + x
    )

    assert out.shape == (N, C, D, H, W)
    assert jnp.allclose(out, ref, atol=1e-5, rtol=1e-5), (
        float(jnp.max(jnp.abs(out - ref)))
    )
    print("KERNEL_OK")
</pallas_src>

<mosaic_0001>
module attributes {stable_mosaic.version = 11 : i64} {
  func.func @_cpe_kernel(%arg0: i32, %arg1: i32, %arg2: memref<27x128xf32, #tpu.memory_space<vmem>>, %arg3: memref<1x128xf32, #tpu.memory_space<vmem>>, %arg4: memref<1x10x10x10x128xf32, #tpu.memory_space<vmem>>, %arg5: memref<1x8x8x8x128xf32, #tpu.memory_space<vmem>>) attributes {dimension_semantics = [#tpu.dimension_semantics<parallel>, #tpu.dimension_semantics<parallel>], iteration_bounds = array<i64: 2, 1>, scalar_prefetch = 0 : i64, scratch_operands = 0 : i64, tpu.core_type = #tpu.core_type<tc>, window_params = [{transform_indices = @transform_0, window_bounds = array<i64: 27, 128>}, {transform_indices = @transform_1, window_bounds = array<i64: 1, 128>}, {transform_indices = @transform_2, window_bounds = array<i64: 1, 10, 10, 10, 128>}, {transform_indices = @transform_3, window_bounds = array<i64: 1, 8, 8, 8, 128>}]} {
    %c0 = arith.constant 0 : index
    %c0_0 = arith.constant 0 : index
    %0 = vector.load %arg3[%c0, %c0_0] : memref<1x128xf32, #tpu.memory_space<vmem>>, vector<1x128xf32>
    %1 = vector.shape_cast %0 : vector<1x128xf32> to vector<1x1x128xf32>
    %c0_i32 = arith.constant 0 : i32
    %c8_i32 = arith.constant 8 : i32
    %2 = arith.addi %c0_i32, %c8_i32 : i32
    %c1_i32 = arith.constant 1 : i32
    scf.for %arg6 = %c0_i32 to %2 step %c1_i32  : i32 {
      %c1_i32_2 = arith.constant 1 : i32
      %3 = arith.muli %arg6, %c1_i32_2 : i32
      %c0_i32_3 = arith.constant 0 : i32
      %4 = arith.addi %c0_i32_3, %3 : i32
      %cst = arith.constant 0.000000e+00 : f32
      %5 = vector.broadcast %cst : f32 to vector<8x8x128xf32>
      %c0_i32_4 = arith.constant 0 : i32
      %6 = arith.addi %4, %c0_i32_4 : i32
      %c0_5 = arith.constant 0 : index
      %7 = arith.index_cast %6 : i32 to index
      %c0_6 = arith.constant 0 : index
      %c0_7 = arith.constant 0 : index
      %c0_8 = arith.constant 0 : index
      %8 = vector.load %arg4[%c0_5, %7, %c0_6, %c0_7, %c0_8] : memref<1x10x10x10x128xf32, #tpu.memory_space<vmem>>, vector<1x1x10x10x128xf32>
      %9 = vector.shape_cast %8 : vector<1x1x10x10x128xf32> to vector<10x10x128xf32>
      %10 = vector.extract_strided_slice %9 {offsets = [0, 0, 0], sizes = [10, 8, 128], strides = [1, 1, 1]} : vector<10x10x128xf32> to vector<10x8x128xf32>
      %11 = vector.extract_strided_slice %9 {offsets = [0, 1, 0], sizes = [10, 8, 128], strides = [1, 1, 1]} : vector<10x10x128xf32> to vector<10x8x128xf32>
      %12 = vector.extract_strided_slice %9 {offsets = [0, 2, 0], sizes = [10, 8, 128], strides = [1, 1, 1]} : vector<10x10x128xf32> to vector<10x8x128xf32>
      %c0_9 = arith.constant 0 : index
      %c0_10 = arith.constant 0 : index
      %13 = vector.load %arg2[%c0_9, %c0_10] : memref<27x128xf32, #tpu.memory_space<vmem>>, vector<1x128xf32>
      %14 = vector.shape_cast %13 : vector<1x128xf32> to vector<128xf32>
      %15 = vector.shape_cast %14 : vector<128xf32> to vector<1x1x128xf32>
      %16 = vector.extract_strided_slice %10 {offsets = [0, 0, 0], sizes = [8, 8, 128], strides = [1, 1, 1]} : vector<10x8x128xf32> to vector<8x8x128xf32>
      %17 = vector.broadcast %15 : vector<1x1x128xf32> to vector<8x8x128xf32>
      %18 = arith.mulf %17, %16 : vector<8x8x128xf32>
      %19 = arith.addf %5, %18 : vector<8x8x128xf32>
      %c1 = arith.constant 1 : index
      %c0_11 = arith.constant 0 : index
      %20 = vector.load %arg2[%c1, %c0_11] : memref<27x128xf32, #tpu.memory_space<vmem>>, vector<1x128xf32>
      %21 = vector.shape_cast %20 : vector<1x128xf32> to vector<128xf32>
      %22 = vector.shape_cast %21 : vector<128xf32> to vector<1x1x128xf32>
      %23 = vector.extract_strided_slice %11 {offsets = [0, 0, 0], sizes = [8, 8, 128], strides = [1, 1, 1]} : vector<10x8x128xf32> to vector<8x8x128xf32>
      %24 = vector.broadcast %22 : vector<1x1x128xf32> to vector<8x8x128xf32>
      %25 = arith.mulf %24, %23 : vector<8x8x128xf32>
      %26 = arith.addf %19, %25 : vector<8x8x128xf32>
      %c2 = arith.constant 2 : index
      %c0_12 = arith.constant 0 : index
      %27 = vector.load %arg2[%c2, %c0_12] : memref<27x128xf32, #tpu.memory_space<vmem>>, vector<1x128xf32>
      %28 = vector.shape_cast %27 : vector<1x128xf32> to vector<128xf32>
      %29 = vector.shape_cast %28 : vector<128xf32> to vector<1x1x128xf32>
      %30 = vector.extract_strided_slice %12 {offsets = [0, 0, 0], sizes = [8, 8, 128], strides = [1, 1, 1]} : vector<10x8x128xf32> to vector<8x8x128xf32>
      %31 = vector.broadcast %29 : vector<1x1x128xf32> to vector<8x8x128xf32>
      %32 = arith.mulf %31, %30 : vector<8x8x128xf32>
      %33 = arith.addf %26, %32 : vector<8x8x128xf32>
      %c3 = arith.constant 3 : index
      %c0_13 = arith.constant 0 : index
      %34 = vector.load %arg2[%c3, %c0_13] : memref<27x128xf32, #tpu.memory_space<vmem>>, vector<1x128xf32>
      %35 = vector.shape_cast %34 : vector<1x128xf32> to vector<128xf32>
      %36 = vector.shape_cast %35 : vector<128xf32> to vector<1x1x128xf32>
      %37 = vector.extract_strided_slice %10 {offsets = [1, 0, 0], sizes = [8, 8, 128], strides = [1, 1, 1]} : vector<10x8x128xf32> to vector<8x8x128xf32>
      %38 = vector.broadcast %36 : vector<1x1x128xf32> to vector<8x8x128xf32>
      %39 = arith.mulf %38, %37 : vector<8x8x128xf32>
      %40 = arith.addf %33, %39 : vector<8x8x128xf32>
      %c4 = arith.constant 4 : index
      %c0_14 = arith.constant 0 : index
      %41 = vector.load %arg2[%c4, %c0_14] : memref<27x128xf32, #tpu.memory_space<vmem>>, vector<1x128xf32>
      %42 = vector.shape_cast %41 : vector<1x128xf32> to vector<128xf32>
      %43 = vector.shape_cast %42 : vector<128xf32> to vector<1x1x128xf32>
      %44 = vector.extract_strided_slice %11 {offsets = [1, 0, 0], sizes = [8, 8, 128], strides = [1, 1, 1]} : vector<10x8x128xf32> to vector<8x8x128xf32>
      %45 = vector.broadcast %43 : vector<1x1x128xf32> to vector<8x8x128xf32>
      %46 = arith.mulf %45, %44 : vector<8x8x128xf32>
      %47 = arith.addf %40, %46 : vector<8x8x128xf32>
      %c5 = arith.constant 5 : index
      %c0_15 = arith.constant 0 : index
      %48 = vector.load %arg2[%c5, %c0_15] : memref<27x128xf32, #tpu.memory_space<vmem>>, vector<1x128xf32>
      %49 = vector.shape_cast %48 : vector<1x128xf32> to vector<128xf32>
      %50 = vector.shape_cast %49 : vector<128xf32> to vector<1x1x128xf32>
      %51 = vector.extract_strided_slice %12 {offsets = [1, 0, 0], sizes = [8, 8, 128], strides = [1, 1, 1]} : vector<10x8x128xf32> to vector<8x8x128xf32>
      %52 = vector.broadcast %50 : vector<1x1x128xf32> to vector<8x8x128xf32>
      %53 = arith.mulf %52, %51 : vector<8x8x128xf32>
      %54 = arith.addf %47, %53 : vector<8x8x128xf32>
      %c6 = arith.constant 6 : index
      %c0_16 = arith.constant 0 : index
      %55 = vector.load %arg2[%c6, %c0_16] : memref<27x128xf32, #tpu.memory_space<vmem>>, vector<1x128xf32>
      %56 = vector.shape_cast %55 : vector<1x128xf32> to vector<128xf32>
      %57 = vector.shape_cast %56 : vector<128xf32> to vector<1x1x128xf32>
      %58 = vector.extract_strided_slice %10 {offsets = [2, 0, 0], sizes = [8, 8, 128], strides = [1, 1, 1]} : vector<10x8x128xf32> to vector<8x8x128xf32>
      %59 = vector.broadcast %57 : vector<1x1x128xf32> to vector<8x8x128xf32>
      %60 = arith.mulf %59, %58 : vector<8x8x128xf32>
      %61 = arith.addf %54, %60 : vector<8x8x128xf32>
      %c7 = arith.constant 7 : index
      %c0_17 = arith.constant 0 : index
      %62 = vector.load %arg2[%c7, %c0_17] : memref<27x128xf32, #tpu.memory_space<vmem>>, vector<1x128xf32>
      %63 = vector.shape_cast %62 : vector<1x128xf32> to vector<128xf32>
      %64 = vector.shape_cast %63 : vector<128xf32> to vector<1x1x128xf32>
      %65 = vector.extract_strided_slice %11 {offsets = [2, 0, 0], sizes = [8, 8, 128], strides = [1, 1, 1]} : vector<10x8x128xf32> to vector<8x8x128xf32>
      %66 = vector.broadcast %64 : vector<1x1x128xf32> to vector<8x8x128xf32>
      %67 = arith.mulf %66, %65 : vector<8x8x128xf32>
      %68 = arith.addf %61, %67 : vector<8x8x128xf32>
      %c8 = arith.constant 8 : index
      %c0_18 = arith.constant 0 : index
      %69 = vector.load %arg2[%c8, %c0_18] : memref<27x128xf32, #tpu.memory_space<vmem>>, vector<1x128xf32>
      %70 = vector.shape_cast %69 : vector<1x128xf32> to vector<128xf32>
      %71 = vector.shape_cast %70 : vector<128xf32> to vector<1x1x128xf32>
      %72 = vector.extract_strided_slice %12 {offsets = [2, 0, 0], sizes = [8, 8, 128], strides = [1, 1, 1]} : vector<10x8x128xf32> to vector<8x8x128xf32>
      %73 = vector.broadcast %71 : vector<1x1x128xf32> to vector<8x8x128xf32>
      %74 = arith.mulf %73, %72 : vector<8x8x128xf32>
      %75 = arith.addf %68, %74 : vector<8x8x128xf32>
      %c1_i32_19 = arith.constant 1 : i32
      %76 = arith.addi %4, %c1_i32_19 : i32
      %c0_20 = arith.constant 0 : index
      %77 = arith.index_cast %76 : i32 to index
      %c0_21 = arith.constant 0 : index
      %c0_22 = arith.constant 0 : index
      %c0_23 = arith.constant 0 : index
      %78 = vector.load %arg4[%c0_20, %77, %c0_21, %c0_22, %c0_23] : memref<1x10x10x10x128xf32, #tpu.memory_space<vmem>>, vector<1x1x10x10x128xf32>
      %79 = vector.shape_cast %78 : vector<1x1x10x10x128xf32> to vector<10x10x128xf32>
      %80 = vector.extract_strided_slice %79 {offsets = [0, 0, 0], sizes = [10, 8, 128], strides = [1, 1, 1]} : vector<10x10x128xf32> to vector<10x8x128xf32>
      %81 = vector.extract_strided_slice %79 {offsets = [0, 1, 0], sizes = [10, 8, 128], strides = [1, 1, 1]} : vector<10x10x128xf32> to vector<10x8x128xf32>
      %82 = vector.extract_strided_slice %79 {offsets = [0, 2, 0], sizes = [10, 8, 128], strides = [1, 1, 1]} : vector<10x10x128xf32> to vector<10x8x128xf32>
      %c9 = arith.constant 9 : index
      %c0_24 = arith.constant 0 : index
      %83 = vector.load %arg2[%c9, %c0_24] : memref<27x128xf32, #tpu.memory_space<vmem>>, vector<1x128xf32>
      %84 = vector.shape_cast %83 : vector<1x128xf32> to vector<128xf32>
      %85 = vector.shape_cast %84 : vector<128xf32> to vector<1x1x128xf32>
      %86 = vector.extract_strided_slice %80 {offsets = [0, 0, 0], sizes = [8, 8, 128], strides = [1, 1, 1]} : vector<10x8x128xf32> to vector<8x8x128xf32>
      %87 = vector.broadcast %85 : vector<1x1x128xf32> to vector<8x8x128xf32>
      %88 = arith.mulf %87, %86 : vector<8x8x128xf32>
      %89 = arith.addf %75, %88 : vector<8x8x128xf32>
      %c10 = arith.constant 10 : index
      %c0_25 = arith.constant 0 : index
      %90 = vector.load %arg2[%c10, %c0_25] : memref<27x128xf32, #tpu.memory_space<vmem>>, vector<1x128xf32>
      %91 = vector.shape_cast %90 : vector<1x128xf32> to vector<128xf32>
      %92 = vector.shape_cast %91 : vector<128xf32> to vector<1x1x128xf32>
      %93 = vector.extract_strided_slice %81 {offsets = [0, 0, 0], sizes = [8, 8, 128], strides = [1, 1, 1]} : vector<10x8x128xf32> to vector<8x8x128xf32>
      %94 = vector.broadcast %92 : vector<1x1x128xf32> to vector<8x8x128xf32>
      %95 = arith.mulf %94, %93 : vector<8x8x128xf32>
      %96 = arith.addf %89, %95 : vector<8x8x128xf32>
      %c11 = arith.constant 11 : index
      %c0_26 = arith.constant 0 : index
      %97 = vector.load %arg2[%c11, %c0_26] : memref<27x128xf32, #tpu.memory_space<vmem>>, vector<1x128xf32>
      %98 = vector.shape_cast %97 : vector<1x128xf32> to vector<128xf32>
      %99 = vector.shape_cast %98 : vector<128xf32> to vector<1x1x128xf32>
      %100 = vector.extract_strided_slice %82 {offsets = [0, 0, 0], sizes = [8, 8, 128], strides = [1, 1, 1]} : vector<10x8x128xf32> to vector<8x8x128xf32>
      %101 = vector.broadcast %99 : vector<1x1x128xf32> to vector<8x8x128xf32>
      %102 = arith.mulf %101, %100 : vector<8x8x128xf32>
      %103 = arith.addf %96, %102 : vector<8x8x128xf32>
      %c12 = arith.constant 12 : index
      %c0_27 = arith.constant 0 : index
      %104 = vector.load %arg2[%c12, %c0_27] : memref<27x128xf32, #tpu.memory_space<vmem>>, vector<1x128xf32>
      %105 = vector.shape_cast %104 : vector<1x128xf32> to vector<128xf32>
      %106 = vector.shape_cast %105 : vector<128xf32> to vector<1x1x128xf32>
      %107 = vector.extract_strided_slice %80 {offsets = [1, 0, 0], sizes = [8, 8, 128], strides = [1, 1, 1]} : vector<10x8x128xf32> to vector<8x8x128xf32>
      %108 = vector.broadcast %106 : vector<1x1x128xf32> to vector<8x8x128xf32>
      %109 = arith.mulf %108, %107 : vector<8x8x128xf32>
      %110 = arith.addf %103, %109 : vector<8x8x128xf32>
      %c13 = arith.constant 13 : index
      %c0_28 = arith.constant 0 : index
      %111 = vector.load %arg2[%c13, %c0_28] : memref<27x128xf32, #tpu.memory_space<vmem>>, vector<1x128xf32>
      %112 = vector.shape_cast %111 : vector<1x128xf32> to vector<128xf32>
      %113 = vector.shape_cast %112 : vector<128xf32> to vector<1x1x128xf32>
      %114 = vector.extract_strided_slice %81 {offsets = [1, 0, 0], sizes = [8, 8, 128], strides = [1, 1, 1]} : vector<10x8x128xf32> to vector<8x8x128xf32>
      %115 = vector.broadcast %113 : vector<1x1x128xf32> to vector<8x8x128xf32>
      %116 = arith.mulf %115, %114 : vector<8x8x128xf32>
      %117 = arith.addf %110, %116 : vector<8x8x128xf32>
      %c14 = arith.constant 14 : index
      %c0_29 = arith.constant 0 : index
      %118 = vector.load %arg2[%c14, %c0_29] : memref<27x128xf32, #tpu.memory_space<vmem>>, vector<1x128xf32>
      %119 = vector.shape_cast %118 : vector<1x128xf32> to vector<128xf32>
      %120 = vector.shape_cast %119 : vector<128xf32> to vector<1x1x128xf32>
      %121 = vector.extract_strided_slice %82 {offsets = [1, 0, 0], sizes = [8, 8, 128], strides = [1, 1, 1]} : vector<10x8x128xf32> to vector<8x8x128xf32>
      %122 = vector.broadcast %120 : vector<1x1x128xf32> to vector<8x8x128xf32>
      %123 = arith.mulf %122, %121 : vector<8x8x128xf32>
      %124 = arith.addf %117, %123 : vector<8x8x128xf32>
      %c15 = arith.constant 15 : index
      %c0_30 = arith.constant 0 : index
      %125 = vector.load %arg2[%c15, %c0_30] : memref<27x128xf32, #tpu.memory_space<vmem>>, vector<1x128xf32>
      %126 = vector.shape_cast %125 : vector<1x128xf32> to vector<128xf32>
      %127 = vector.shape_cast %126 : vector<128xf32> to vector<1x1x128xf32>
      %128 = vector.extract_strided_slice %80 {offsets = [2, 0, 0], sizes = [8, 8, 128], strides = [1, 1, 1]} : vector<10x8x128xf32> to vector<8x8x128xf32>
      %129 = vector.broadcast %127 : vector<1x1x128xf32> to vector<8x8x128xf32>
      %130 = arith.mulf %129, %128 : vector<8x8x128xf32>
      %131 = arith.addf %124, %130 : vector<8x8x128xf32>
      %c16 = arith.constant 16 : index
      %c0_31 = arith.constant 0 : index
      %132 = vector.load %arg2[%c16, %c0_31] : memref<27x128xf32, #tpu.memory_space<vmem>>, vector<1x128xf32>
      %133 = vector.shape_cast %132 : vector<1x128xf32> to vector<128xf32>
      %134 = vector.shape_cast %133 : vector<128xf32> to vector<1x1x128xf32>
      %135 = vector.extract_strided_slice %81 {offsets = [2, 0, 0], sizes = [8, 8, 128], strides = [1, 1, 1]} : vector<10x8x128xf32> to vector<8x8x128xf32>
      %136 = vector.broadcast %134 : vector<1x1x128xf32> to vector<8x8x128xf32>
      %137 = arith.mulf %136, %135 : vector<8x8x128xf32>
      %138 = arith.addf %131, %137 : vector<8x8x128xf32>
      %c17 = arith.constant 17 : index
      %c0_32 = arith.constant 0 : index
      %139 = vector.load %arg2[%c17, %c0_32] : memref<27x128xf32, #tpu.memory_space<vmem>>, vector<1x128xf32>
      %140 = vector.shape_cast %139 : vector<1x128xf32> to vector<128xf32>
      %141 = vector.shape_cast %140 : vector<128xf32> to vector<1x1x128xf32>
      %142 = vector.extract_strided_slice %82 {offsets = [2, 0, 0], sizes = [8, 8, 128], strides = [1, 1, 1]} : vector<10x8x128xf32> to vector<8x8x128xf32>
      %143 = vector.broadcast %141 : vector<1x1x128xf32> to vector<8x8x128xf32>
      %144 = arith.mulf %143, %142 : vector<8x8x128xf32>
      %145 = arith.addf %138, %144 : vector<8x8x128xf32>
      %c2_i32 = arith.constant 2 : i32
      %146 = arith.addi %4, %c2_i32 : i32
      %c0_33 = arith.constant 0 : index
      %147 = arith.index_cast %146 : i32 to index
      %c0_34 = arith.constant 0 : index
      %c0_35 = arith.constant 0 : index
      %c0_36 = arith.constant 0 : index
      %148 = vector.load %arg4[%c0_33, %147, %c0_34, %c0_35, %c0_36] : memref<1x10x10x10x128xf32, #tpu.memory_space<vmem>>, vector<1x1x10x10x128xf32>
      %149 = vector.shape_cast %148 : vector<1x1x10x10x128xf32> to vector<10x10x128xf32>
      %150 = vector.extract_strided_slice %149 {offsets = [0, 0, 0], sizes = [10, 8, 128], strides = [1, 1, 1]} : vector<10x10x128xf32> to vector<10x8x128xf32>
      %151 = vector.extract_strided_slice %149 {offsets = [0, 1, 0], sizes = [10, 8, 128], strides = [1, 1, 1]} : vector<10x10x128xf32> to vector<10x8x128xf32>
      %152 = vector.extract_strided_slice %149 {offsets = [0, 2, 0], sizes = [10, 8, 128], strides = [1, 1, 1]} : vector<10x10x128xf32> to vector<10x8x128xf32>
      %c18 = arith.constant 18 : index
      %c0_37 = arith.constant 0 : index
      %153 = vector.load %arg2[%c18, %c0_37] : memref<27x128xf32, #tpu.memory_space<vmem>>, vector<1x128xf32>
      %154 = vector.shape_cast %153 : vector<1x128xf32> to vector<128xf32>
      %155 = vector.shape_cast %154 : vector<128xf32> to vector<1x1x128xf32>
      %156 = vector.extract_strided_slice %150 {offsets = [0, 0, 0], sizes = [8, 8, 128], strides = [1, 1, 1]} : vector<10x8x128xf32> to vector<8x8x128xf32>
      %157 = vector.broadcast %155 : vector<1x1x128xf32> to vector<8x8x128xf32>
      %158 = arith.mulf %157, %156 : vector<8x8x128xf32>
      %159 = arith.addf %145, %158 : vector<8x8x128xf32>
      %c19 = arith.constant 19 : index
      %c0_38 = arith.constant 0 : index
      %160 = vector.load %arg2[%c19, %c0_38] : memref<27x128xf32, #tpu.memory_space<vmem>>, vector<1x128xf32>
      %161 = vector.shape_cast %160 : vector<1x128xf32> to vector<128xf32>
      %162 = vector.shape_cast %161 : vector<128xf32> to vector<1x1x128xf32>
      %163 = vector.extract_strided_slice %151 {offsets = [0, 0, 0], sizes = [8, 8, 128], strides = [1, 1, 1]} : vector<10x8x128xf32> to vector<8x8x128xf32>
      %164 = vector.broadcast %162 : vector<1x1x128xf32> to vector<8x8x128xf32>
      %165 = arith.mulf %164, %163 : vector<8x8x128xf32>
      %166 = arith.addf %159, %165 : vector<8x8x128xf32>
      %c20 = arith.constant 20 : index
      %c0_39 = arith.constant 0 : index
      %167 = vector.load %arg2[%c20, %c0_39] : memref<27x128xf32, #tpu.memory_space<vmem>>, vector<1x128xf32>
      %168 = vector.shape_cast %167 : vector<1x128xf32> to vector<128xf32>
      %169 = vector.shape_cast %168 : vector<128xf32> to vector<1x1x128xf32>
      %170 = vector.extract_strided_slice %152 {offsets = [0, 0, 0], sizes = [8, 8, 128], strides = [1, 1, 1]} : vector<10x8x128xf32> to vector<8x8x128xf32>
      %171 = vector.broadcast %169 : vector<1x1x128xf32> to vector<8x8x128xf32>
      %172 = arith.mulf %171, %170 : vector<8x8x128xf32>
      %173 = arith.addf %166, %172 : vector<8x8x128xf32>
      %c21 = arith.constant 21 : index
      %c0_40 = arith.constant 0 : index
      %174 = vector.load %arg2[%c21, %c0_40] : memref<27x128xf32, #tpu.memory_space<vmem>>, vector<1x128xf32>
      %175 = vector.shape_cast %174 : vector<1x128xf32> to vector<128xf32>
      %176 = vector.shape_cast %175 : vector<128xf32> to vector<1x1x128xf32>
      %177 = vector.extract_strided_slice %150 {offsets = [1, 0, 0], sizes = [8, 8, 128], strides = [1, 1, 1]} : vector<10x8x128xf32> to vector<8x8x128xf32>
      %178 = vector.broadcast %176 : vector<1x1x128xf32> to vector<8x8x128xf32>
      %179 = arith.mulf %178, %177 : vector<8x8x128xf32>
      %180 = arith.addf %173, %179 : vector<8x8x128xf32>
      %c22 = arith.constant 22 : index
      %c0_41 = arith.constant 0 : index
      %181 = vector.load %arg2[%c22, %c0_41] : memref<27x128xf32, #tpu.memory_space<vmem>>, vector<1x128xf32>
      %182 = vector.shape_cast %181 : vector<1x128xf32> to vector<128xf32>
      %183 = vector.shape_cast %182 : vector<128xf32> to vector<1x1x128xf32>
      %184 = vector.extract_strided_slice %151 {offsets = [1, 0, 0], sizes = [8, 8, 128], strides = [1, 1, 1]} : vector<10x8x128xf32> to vector<8x8x128xf32>
      %185 = vector.broadcast %183 : vector<1x1x128xf32> to vector<8x8x128xf32>
      %186 = arith.mulf %185, %184 : vector<8x8x128xf32>
      %187 = arith.addf %180, %186 : vector<8x8x128xf32>
      %c23 = arith.constant 23 : index
      %c0_42 = arith.constant 0 : index
      %188 = vector.load %arg2[%c23, %c0_42] : memref<27x128xf32, #tpu.memory_space<vmem>>, vector<1x128xf32>
      %189 = vector.shape_cast %188 : vector<1x128xf32> to vector<128xf32>
      %190 = vector.shape_cast %189 : vector<128xf32> to vector<1x1x128xf32>
      %191 = vector.extract_strided_slice %152 {offsets = [1, 0, 0], sizes = [8, 8, 128], strides = [1, 1, 1]} : vector<10x8x128xf32> to vector<8x8x128xf32>
      %192 = vector.broadcast %190 : vector<1x1x128xf32> to vector<8x8x128xf32>
      %193 = arith.mulf %192, %191 : vector<8x8x128xf32>
      %194 = arith.addf %187, %193 : vector<8x8x128xf32>
      %c24 = arith.constant 24 : index
      %c0_43 = arith.constant 0 : index
      %195 = vector.load %arg2[%c24, %c0_43] : memref<27x128xf32, #tpu.memory_space<vmem>>, vector<1x128xf32>
      %196 = vector.shape_cast %195 : vector<1x128xf32> to vector<128xf32>
      %197 = vector.shape_cast %196 : vector<128xf32> to vector<1x1x128xf32>
      %198 = vector.extract_strided_slice %150 {offsets = [2, 0, 0], sizes = [8, 8, 128], strides = [1, 1, 1]} : vector<10x8x128xf32> to vector<8x8x128xf32>
      %199 = vector.broadcast %197 : vector<1x1x128xf32> to vector<8x8x128xf32>
      %200 = arith.mulf %199, %198 : vector<8x8x128xf32>
      %201 = arith.addf %194, %200 : vector<8x8x128xf32>
      %c25 = arith.constant 25 : index
      %c0_44 = arith.constant 0 : index
      %202 = vector.load %arg2[%c25, %c0_44] : memref<27x128xf32, #tpu.memory_space<vmem>>, vector<1x128xf32>
      %203 = vector.shape_cast %202 : vector<1x128xf32> to vector<128xf32>
      %204 = vector.shape_cast %203 : vector<128xf32> to vector<1x1x128xf32>
      %205 = vector.extract_strided_slice %151 {offsets = [2, 0, 0], sizes = [8, 8, 128], strides = [1, 1, 1]} : vector<10x8x128xf32> to vector<8x8x128xf32>
      %206 = vector.broadcast %204 : vector<1x1x128xf32> to vector<8x8x128xf32>
      %207 = arith.mulf %206, %205 : vector<8x8x128xf32>
      %208 = arith.addf %201, %207 : vector<8x8x128xf32>
      %c26 = arith.constant 26 : index
      %c0_45 = arith.constant 0 : index
      %209 = vector.load %arg2[%c26, %c0_45] : memref<27x128xf32, #tpu.memory_space<vmem>>, vector<1x128xf32>
      %210 = vector.shape_cast %209 : vector<1x128xf32> to vector<128xf32>
      %211 = vector.shape_cast %210 : vector<128xf32> to vector<1x1x128xf32>
      %212 = vector.extract_strided_slice %152 {offsets = [2, 0, 0], sizes = [8, 8, 128], strides = [1, 1, 1]} : vector<10x8x128xf32> to vector<8x8x128xf32>
      %213 = vector.broadcast %211 : vector<1x1x128xf32> to vector<8x8x128xf32>
      %214 = arith.mulf %213, %212 : vector<8x8x128xf32>
      %215 = arith.addf %208, %214 : vector<8x8x128xf32>
      %216 = vector.broadcast %1 : vector<1x1x128xf32> to vector<8x8x128xf32>
      %217 = arith.addf %215, %216 : vector<8x8x128xf32>
      %c0_46 = arith.constant 0 : index
      %218 = arith.index_cast %4 : i32 to index
      %c0_47 = arith.constant 0 : index
      %c0_48 = arith.constant 0 : index
      %c0_49 = arith.constant 0 : index
      %219 = vector.load %arg5[%c0_46, %218, %c0_47, %c0_48, %c0_49] : memref<1x8x8x8x128xf32, #tpu.memory_space<vmem>>, vector<1x1x8x8x128xf32>
      %220 = vector.shape_cast %219 : vector<1x1x8x8x128xf32> to vector<8x8x128xf32>
      %221 = vector.shape_cast %217 : vector<8x8x128xf32> to vector<1x1x8x8x128xf32>
      tpu.vector_store %arg5[%c0_46, %218, %c0_47, %c0_48, %c0_49], %221 {strides = array<i32>} : memref<1x8x8x8x128xf32, #tpu.memory_space<vmem>>, vector<1x1x8x8x128xf32>,
    }
    %c8_i32_1 = arith.constant 8 : i32
    return
  }
  func.func @transform_0(%arg0: i32, %arg1: i32) -> (i32, i32) {
    %c0_i32 = arith.constant 0 : i32
    %c0_i32_0 = arith.constant 0 : i32
    return %c0_i32, %arg1 : i32, i32
  }
  func.func @transform_1(%arg0: i32, %arg1: i32) -> (i32, i32) {
    %c0_i32 = arith.constant 0 : i32
    %c0_i32_0 = arith.constant 0 : i32
    return %c0_i32, %arg1 : i32, i32
  }
  func.func @transform_2(%arg0: i32, %arg1: i32) -> (i32, i32, i32, i32, i32) {
    %c0_i32 = arith.constant 0 : i32
    %c0_i32_0 = arith.constant 0 : i32
    %c0_i32_1 = arith.constant 0 : i32
    %c0_i32_2 = arith.constant 0 : i32
    return %arg0, %c0_i32, %c0_i32_0, %c0_i32_1, %arg1 : i32, i32, i32, i32, i32
  }
  func.func @transform_3(%arg0: i32, %arg1: i32) -> (i32, i32, i32, i32, i32) {
    %c0_i32 = arith.constant 0 : i32
    %c0_i32_0 = arith.constant 0 : i32
    %c0_i32_1 = arith.constant 0 : i32
    %c0_i32_2 = arith.constant 0 : i32
    return %arg0, %c0_i32, %c0_i32_0, %c0_i32_1, %arg1 : i32, i32, i32, i32, i32
  }
}

</mosaic_0001>

<llo_original>
// kernel: tpu_custom_call.1
$region0: #{tpu_custom_call.1}
  #allocation0 [shape = 'u32[]', space=smem, size = 0x4, offset = 0x4, fixed_abs, tag = 'smem constant byte address 0x4 - core index']
  #allocation1 [shape = 'u32[144,128]{1,0:T(1,128)}', space=vmem, size = 0x12000, scoped, tag = 'internal scratch']
  %s0 = inlined_call_operand.vmem [shape: f32[27,128], index: 0, kind: input, shape index: {}]
  %s1 = inlined_call_operand.vmem [shape: f32[1,128], index: 1, kind: input, shape index: {}]
  %s2 = inlined_call_operand.vmem [shape: f32[2,10,10,10,128], index: 2, kind: input, shape index: {}]
  %s3 = inlined_call_operand.hbm [shape: f32[2,8,8,8,128], index: 3, kind: output, shape index: {}]
  %s4 = sld [smem:[#allocation0]]
  $region52: #{tpu_custom_call.1} parent=0
    _
  %s6 = ssub.s32 1, %s4
  %s7 = scalar_select 0, %s6, %s4
  $region1: #{tpu_custom_call.1} parent=0
    #allocation2 [shape = 'u8[524288]{0}', space=vmem, size = 0x80000, scoped, tag = 'output window, operand 0']
    #allocation3 [shape = 's32[2]{0}', space=sflag, size = 0x8, scoped, tag = 'scoped memory for tpu_custom_call.1']
    %8 = vsyncpa [#allocation3], 0
    %s9 = scalar_lea.sflag [#allocation3], 1
    %10 = vsyncpa %s9, 0
    loop: start=0, step=1, limit=4
    $region2: #{tpu_custom_call.1} parent=1 // loop_pre_header
      _
    $region3: #{tpu_custom_call.1} parent=1 // loop_header
      %s12 = sphi 0, %s16
      %p13 = scmp.ge.s32.totalorder %s12, 4
      %s19 = sphi 0, %s31
      %s20 = sphi 0, %s27
      %s21 = sphi 0, %s19
      %s22 = sphi 0, %s20
      %s23 = sphi 0, %s21
      %s24 = sphi 0, %s22
      %s34 = sphi 0, %s36
      %s37 = sphi 0, %s34
      %s38 = sphi 0, %s37
      %s54 = sphi 0, %s38
      %s60 = sphi 0, %s62
      %s63 = sphi 0, %s60
      %s64 = sphi 0, %s63
      %s80 = sphi 0, %s64
      %s88 = sphi 0, %s90
      %s91 = sphi 0, %s88
      %s92 = sphi 0, %s91
      %s108 = sphi 0, %s92
      %s116 = sphi 0, %s118
      %s119 = sphi 0, %s116
      %s120 = sphi 0, %s119
      %s136 = sphi 0, %s120
    $region4: #{tpu_custom_call.1} parent=1 // loop_header_branch
      %15 = sbr.rel (%p13) target = $region8
    $region5: #{tpu_custom_call.1} parent=1 // loop_body
      %s17 = ssub.s32 %s12, 1
      %s18 = ssub.s32 %s12, 2
      %s25 = sadd.s32 1, %s20
      %p26 = scmp.ge.s32.totalorder %s25, 1
      %s27 = scalar_select %p26, 0, %s25
      %s28 = sadd.s32 1, %s19
      %s29 = scalar_select %p26, %s28, %s19
      %p30 = scmp.ge.s32.totalorder %s29, 2
      %s31 = scalar_select %p30, 0, %s29
      %s32 = ssub.s32 %s20, %s27
      %p33 = scmp.eq.s32.totalorder %s32, 0
      %s35 = sadd.s32 %s34, 1
      %s36 = scalar_select %p33, %s34, %s35
      %p39 = pneg %p33
      %p40 = scmp.eq.s32.totalorder %s12, 1
      %p41 = por %p39, %p40
      %p42 = scmp.ne.s32.totalorder %s34, %s37
      %p43 = scmp.eq.s32.totalorder %s12, 0
      %p44 = por %p42, %p43
      %p45 = scmp.ne.s32.totalorder %s34, %s37
      %p46 = scmp.eq.s32.totalorder %s17, 1
      %p47 = por %p45, %p46
      %p48 = scmp.ne.s32.totalorder %s37, %s38
      %p49 = scmp.eq.s32.totalorder %s17, 0
      %p50 = por %p48, %p49
      %p51 = scmp.ne.s32.totalorder %s37, %s38
      %p52 = scmp.eq.s32.totalorder %s18, 1
      %p53 = por %p51, %p52
      %p55 = scmp.ne.s32.totalorder %s38, %s54
      %p56 = scmp.eq.s32.totalorder %s18, 0
      %p57 = por %p55, %p56
      %s58 = ssub.s32 %s20, %s27
      %p59 = scmp.eq.s32.totalorder %s58, 0
      %s61 = sadd.s32 %s60, 1
      %s62 = scalar_select %p59, %s60, %s61
      %p65 = pneg %p59
      %p66 = scmp.eq.s32.totalorder %s12, 1
      %p67 = por %p65, %p66
      %p68 = scmp.ne.s32.totalorder %s60, %s63
      %p69 = scmp.eq.s32.totalorder %s12, 0
      %p70 = por %p68, %p69
      %p71 = scmp.ne.s32.totalorder %s60, %s63
      %p72 = scmp.eq.s32.totalorder %s17, 1
      %p73 = por %p71, %p72
      %p74 = scmp.ne.s32.totalorder %s63, %s64
      %p75 = scmp.eq.s32.totalorder %s17, 0
      %p76 = por %p74, %p75
      %p77 = scmp.ne.s32.totalorder %s63, %s64
      %p78 = scmp.eq.s32.totalorder %s18, 1
      %p79 = por %p77, %p78
      %p81 = scmp.ne.s32.totalorder %s64, %s80
      %p82 = scmp.eq.s32.totalorder %s18, 0
      %p83 = por %p81, %p82
      %s84 = ssub.s32 %s19, %s31
      %s85 = ssub.s32 %s20, %s27
      %s86 = sor.u32 %s84, %s85
      %p87 = scmp.eq.s32.totalorder %s86, 0
      %s89 = sadd.s32 %s88, 1
      %s90 = scalar_select %p87, %s88, %s89
      %p93 = pneg %p87
      %p94 = scmp.eq.s32.totalorder %s12, 1
      %p95 = por %p93, %p94
      %p96 = scmp.ne.s32.totalorder %s88, %s91
      %p97 = scmp.eq.s32.totalorder %s12, 0
      %p98 = por %p96, %p97
      %p99 = scmp.ne.s32.totalorder %s88, %s91
      %p100 = scmp.eq.s32.totalorder %s17, 1
      %p101 = por %p99, %p100
      %p102 = scmp.ne.s32.totalorder %s91, %s92
      %p103 = scmp.eq.s32.totalorder %s17, 0
      %p104 = por %p102, %p103
      %p105 = scmp.ne.s32.totalorder %s91, %s92
      %p106 = scmp.eq.s32.totalorder %s18, 1
      %p107 = por %p105, %p106
      %p109 = scmp.ne.s32.totalorder %s92, %s108
      %p110 = scmp.eq.s32.totalorder %s18, 0
      %p111 = por %p109, %p110
      %s112 = ssub.s32 %s19, %s31
      %s113 = ssub.s32 %s20, %s27
      %s114 = sor.u32 %s112, %s113
      %p115 = scmp.eq.s32.totalorder %s114, 0
      %s117 = sadd.s32 %s116, 1
      %s118 = scalar_select %p115, %s116, %s117
      %p121 = pneg %p115
      %p122 = scmp.eq.s32.totalorder %s12, 1
      %p123 = por %p121, %p122
      %p124 = scmp.ne.s32.totalorder %s116, %s119
      %p125 = scmp.eq.s32.totalorder %s12, 0
      %p126 = por %p124, %p125
      %p127 = scmp.ne.s32.totalorder %s116, %s119
      %p128 = scmp.eq.s32.totalorder %s17, 1
      %p129 = por %p127, %p128
      %p130 = scmp.ne.s32.totalorder %s119, %s120
      %p131 = scmp.eq.s32.totalorder %s17, 0
      %p132 = por %p130, %p131
      %p133 = scmp.ne.s32.totalorder %s119, %s120
      %p134 = scmp.eq.s32.totalorder %s18, 1
      %p135 = por %p133, %p134
      %p137 = scmp.ne.s32.totalorder %s120, %s136
      %p138 = scmp.eq.s32.totalorder %s18, 0
      %p139 = por %p137, %p138
      %p140 = scmp.le.s32.totalorder 1, %s12
      %p141 = scmp.lt.s32.totalorder %s12, 3
      %p142 = pnand %p140, %p141
      %p143 = pneg %p142
      // Predicated region
      $region9: #{tpu_custom_call.1} parent=5 // pred_check
        _
      $region10: #{tpu_custom_call.1} parent=5 // pred_check_branch
        %145 = sbr.rel (%p142) target = $region12
      $region11: #{tpu_custom_call.1} parent=5 // pred_region
        %s146 = ssub.s32 %s12, 1
        // Predicated region
        $region13: #{tpu_custom_call.1} parent=11 // pred_check
          %p147 = pneg %p50
        $region14: #{tpu_custom_call.1} parent=11 // pred_check_branch
          %149 = sbr.rel (%p147) target = $region16
        $region15: #{tpu_custom_call.1} parent=11 // pred_region
          %p150 = scmp.lt.s32.totalorder %s22, 0
          %s151 = scalar_select %p150, %s22, 0
          %s152 = smul.addr %s151, 8
          %s153 = scalar_lea.vmem %s0, %s152
        $region16: #{tpu_custom_call.1} parent=11 // pred_fallthru
          _
        // Predicated region
        $region17: #{tpu_custom_call.1} parent=11 // pred_check
          %p154 = pneg %p76
        $region18: #{tpu_custom_call.1} parent=11 // pred_check_branch
          %156 = sbr.rel (%p154) target = $region20
        $region19: #{tpu_custom_call.1} parent=11 // pred_region
          %p157 = scmp.lt.s32.totalorder %s22, 0
          %s158 = scalar_select %p157, %s22, 0
          %s159 = scalar_lea.vmem %s1, %s158
        $region20: #{tpu_custom_call.1} parent=11 // pred_fallthru
          _
      $region12: #{tpu_custom_call.1} parent=5 // pred_fallthru
        _
      %p160 = scmp.lt.s32.totalorder %s12, 2
      // Predicated region
      $region21: #{tpu_custom_call.1} parent=5 // pred_check
        %p161 = pneg %p160
      $region22: #{tpu_custom_call.1} parent=5 // pred_check_branch
        %163 = sbr.rel (%p161) target = $region24
      $region23: #{tpu_custom_call.1} parent=5 // pred_region
        // Predicated region
        $region25: #{tpu_custom_call.1} parent=23 // pred_check
          %p164 = pneg %p98
        $region26: #{tpu_custom_call.1} parent=23 // pred_check_branch
          %166 = sbr.rel (%p164) target = $region28
        $region27: #{tpu_custom_call.1} parent=23 // pred_region
          %p167 = scmp.lt.s32.totalorder %s19, 1
          %s168 = scalar_select %p167, %s19, 1
          %p169 = scmp.lt.s32.totalorder %s20, 0
          %s170 = scalar_select %p169, %s20, 0
          %s171 = smul.addr %s168, 200
          %s172 = sadd.s32 %s170, %s171
          %s173 = smul.addr %s172, 8
          %s174 = scalar_lea.vmem %s2, %s173
        $region28: #{tpu_custom_call.1} parent=23 // pred_fallthru
          _
      $region24: #{tpu_custom_call.1} parent=5 // pred_fallthru
        _
      %p175 = scmp.le.s32.totalorder 1, %s12
      %p176 = scmp.lt.s32.totalorder %s12, 3
      %p177 = pnand %p175, %p176
      %p178 = pneg %p177
      // Predicated region
      $region29: #{tpu_custom_call.1} parent=5 // pred_check
        _
      $region30: #{tpu_custom_call.1} parent=5 // pred_check_branch
        %180 = sbr.rel (%p177) target = $region32
      $region31: #{tpu_custom_call.1} parent=5 // pred_region
        %s181 = ssub.s32 %s12, 1
        %p182 = scmp.lt.s32.totalorder %s22, 0
        %s183 = scalar_select %p182, %s22, 0
        %s184 = smul.addr %s183, 8
        %s185 = scalar_lea.vmem %s0, %s184
        %p186 = pneg %p50
        %p187 = pneg %p47
        %p188 = scmp.lt.s32.totalorder %s22, 0
        %s189 = scalar_select %p188, %s22, 0
        %s190 = scalar_lea.vmem %s1, %s189
        %p191 = pneg %p76
        %p192 = pneg %p73
        %p193 = scmp.lt.s32.totalorder %s21, 1
        %s194 = scalar_select %p193, %s21, 1
        %p195 = scmp.lt.s32.totalorder %s22, 0
        %s196 = scalar_select %p195, %s22, 0
        %s197 = smul.addr %s194, 200
        %s198 = sadd.s32 %s196, %s197
        %s199 = smul.addr %s198, 8
        %s200 = scalar_lea.vmem %s2, %s199
        %p201 = pneg %p104
        %p202 = pneg %p101
        %p203 = pneg %p132
        %p204 = pneg %p129
        %s205 = sand.u32 %s119, 1
        %s206 = scalar_lea.sflag [#allocation3], %s205
        %s207 = sand.u32 %s119, 1
        %s208 = smul.addr %s207, 512
        %s209 = scalar_lea.vmem [#allocation2], %s208
        %p210 = scmp.lt.s32.totalorder %s22, 0
        %s211 = scalar_select %p210, %s22, 0
        %s212 = smul.addr %s211, 8
        %s213 = scalar_lea.vmem %s0, %s212
        %p214 = scmp.lt.s32.totalorder %s22, 0
        %s215 = scalar_select %p214, %s22, 0
        %s216 = scalar_lea.vmem %s1, %s215
        %p217 = scmp.lt.s32.totalorder %s21, 1
        %s218 = scalar_select %p217, %s21, 1
        %p219 = scmp.lt.s32.totalorder %s22, 0
        %s220 = scalar_select %p219, %s22, 0
        %s221 = smul.addr %s218, 200
        %s222 = sadd.s32 %s220, %s221
        %s223 = smul.addr %s222, 8
        %s224 = scalar_lea.vmem %s2, %s223
        %v225 = vld [vmem:[%s216] sm:$0x1]
        loop: start=0, step=1, limit=8
        $region33: #{tpu_custom_call.1} parent=31 // loop_pre_header
          _
        $region34: #{tpu_custom_call.1} parent=31 // loop_header
          %s227 = sphi 0, %s231
          %p228 = scmp.ge.s32.totalorder %s227, 8
        $region35: #{tpu_custom_call.1} parent=31 // loop_header_branch
          %230 = sbr.rel (%p228) target = $region39
        $region36: #{tpu_custom_call.1} parent=31 // loop_body
          %s232 = smul.u32 %s227, 160
          %s233 = scalar_lea.vmem %s224, %s232
          %v234 = vld [vmem:[%s233] sm:$0xff]
          %v235 = vld [vmem:[%s233 + $0x8] sm:$0x3]
          %v236 = vld [vmem:[%s233 + $0x10] sm:$0xff]
          %v237 = vld [vmem:[%s233 + $0x18] sm:$0x3]
          %v238 = vld [vmem:[%s233 + $0x20] sm:$0xff]
          %v239 = vld [vmem:[%s233 + $0x28] sm:$0x3]
          %v240 = vld [vmem:[%s233 + $0x30] sm:$0xff]
          %v241 = vld [vmem:[%s233 + $0x38] sm:$0x3]
          %v242 = vld [vmem:[%s233 + $0x40] sm:$0xff]
          %v243 = vld [vmem:[%s233 + $0x48] sm:$0x3]
          %v244 = vld [vmem:[%s233 + $0x50] sm:$0xff]
          %v245 = vld [vmem:[%s233 + $0x58] sm:$0x3]
          %v246 = vld [vmem:[%s233 + $0x60] sm:$0xff]
          %v247 = vld [vmem:[%s233 + $0x68] sm:$0x3]
          %v248 = vld [vmem:[%s233 + $0x70] sm:$0xff]
          %v249 = vld [vmem:[%s233 + $0x78] sm:$0x3]
          %v250 = vld [vmem:[%s233 + $0x80] sm:$0xff]
          %v251 = vld [vmem:[%s233 + $0x88] sm:$0x3]
          %v252 = vld [vmem:[%s233 + $0x90] sm:$0xff]
          %v253 = vld [vmem:[%s233 + $0x98] sm:$0x3]
          %v254 = vld [vmem:[%s213] sm:$0x1]
          %v255 = vlaneseq
          %v256 = vshrl.u32 %v255, 7
          %v257 = vsub.s32 0, %v256
          %v258 = vrot.slane %v254, %v257
          %v259 = vmul.f32 %v258, %v234
          %v260 = vmul.f32 %v258, %v236
          %v261 = vmul.f32 %v258, %v238
          %v262 = vmul.f32 %v258, %v240
          %v263 = vmul.f32 %v258, %v242
          %v264 = vmul.f32 %v258, %v244
          %v265 = vmul.f32 %v258, %v246
          %v266 = vmul.f32 %v258, %v248
          %v267 = vadd.f32 %v259, 0.0
          %v268 = vadd.f32 %v260, 0.0
          %v269 = vadd.f32 %v261, 0.0
          %v270 = vadd.f32 %v262, 0.0
          %v271 = vadd.f32 %v263, 0.0
          %v272 = vadd.f32 %v264, 0.0
          %v273 = vadd.f32 %v265, 0.0
          %v274 = vadd.f32 %v266, 0.0
          %v275 = vld [vmem:[%s213 + $0x1] sm:$0x1]
          %v276 = vlaneseq
          %v277 = vshrl.u32 %v276, 7
          %v278 = vsub.s32 0, %v277
          %v279 = vrot.slane %v275, %v278
          %v280 = vmul.f32 %v279, %v234
          %v281 = vmul.f32 %v279, %v235
          %v282 = vmul.f32 %v279, %v236
          %v283 = vmul.f32 %v279, %v237
          %v284 = vmul.f32 %v279, %v238
          %v285 = vmul.f32 %v279, %v239
          %v286 = vmul.f32 %v279, %v240
          %v287 = vmul.f32 %v279, %v241
          %v288 = vmul.f32 %v279, %v242
          %v289 = vmul.f32 %v279, %v243
          %v290 = vmul.f32 %v279, %v244
          %v291 = vmul.f32 %v279, %v245
          %v292 = vmul.f32 %v279, %v246
          %v293 = vmul.f32 %v279, %v247
          %v294 = vmul.f32 %v279, %v248
          %v295 = vmul.f32 %v279, %v249
          %vm312 = vcmask 1046528
          %v313 = vrot.slane %v280, 1
          %v314 = vrot.slane %v281, 1
          %v315 = vsel %vm312, %v313, %v314
          %v316 = vrot.slane %v282, 1
          %v317 = vrot.slane %v283, 1
          %v318 = vsel %vm312, %v316, %v317
          %v319 = vrot.slane %v284, 1
          %v320 = vrot.slane %v285, 1
          %v321 = vsel %vm312, %v319, %v320
          %v322 = vrot.slane %v286, 1
          %v323 = vrot.slane %v287, 1
          %v324 = vsel %vm312, %v322, %v323
          %v325 = vrot.slane %v288, 1
          %v326 = vrot.slane %v289, 1
          %v327 = vsel %vm312, %v325, %v326
          %v328 = vrot.slane %v290, 1
          %v329 = vrot.slane %v291, 1
          %v330 = vsel %vm312, %v328, %v329
          %v331 = vrot.slane %v292, 1
          %v332 = vrot.slane %v293, 1
          %v333 = vsel %vm312, %v331, %v332
          %v334 = vrot.slane %v294, 1
          %v335 = vrot.slane %v295, 1
          %v336 = vsel %vm312, %v334, %v335
          %v345 = vadd.f32 %v267, %v315
          %v346 = vadd.f32 %v268, %v318
          %v347 = vadd.f32 %v269, %v321
          %v348 = vadd.f32 %v270, %v324
          %v349 = vadd.f32 %v271, %v327
          %v350 = vadd.f32 %v272, %v330
          %v351 = vadd.f32 %v273, %v333
          %v352 = vadd.f32 %v274, %v336
          %v353 = vld [vmem:[%s213 + $0x2] sm:$0x1]
          %v354 = vlaneseq
          %v355 = vshrl.u32 %v354, 7
          %v356 = vsub.s32 0, %v355
          %v357 = vrot.slane %v353, %v356
          %v358 = vmul.f32 %v357, %v234
          %v359 = vmul.f32 %v357, %v235
          %v360 = vmul.f32 %v357, %v236
          %v361 = vmul.f32 %v357, %v237
          %v362 = vmul.f32 %v357, %v238
          %v363 = vmul.f32 %v357, %v239
          %v364 = vmul.f32 %v357, %v240
          %v365 = vmul.f32 %v357, %v241
          %v366 = vmul.f32 %v357, %v242
          %v367 = vmul.f32 %v357, %v243
          %v368 = vmul.f32 %v357, %v244
          %v369 = vmul.f32 %v357, %v245
          %v370 = vmul.f32 %v357, %v246
          %v371 = vmul.f32 %v357, %v247
          %v372 = vmul.f32 %v357, %v248
          %v373 = vmul.f32 %v357, %v249
          %vm390 = vcmask 1045504
          %v391 = vrot.slane %v358, 2
          %v392 = vrot.slane %v359, 2
          %v393 = vsel %vm390, %v391, %v392
          %v394 = vrot.slane %v360, 2
          %v395 = vrot.slane %v361, 2
          %v396 = vsel %vm390, %v394, %v395
          %v397 = vrot.slane %v362, 2
          %v398 = vrot.slane %v363, 2
          %v399 = vsel %vm390, %v397, %v398
          %v400 = vrot.slane %v364, 2
          %v401 = vrot.slane %v365, 2
          %v402 = vsel %vm390, %v400, %v401
          %v403 = vrot.slane %v366, 2
          %v404 = vrot.slane %v367, 2
          %v405 = vsel %vm390, %v403, %v404
          %v406 = vrot.slane %v368, 2
          %v407 = vrot.slane %v369, 2
          %v408 = vsel %vm390, %v406, %v407
          %v409 = vrot.slane %v370, 2
          %v410 = vrot.slane %v371, 2
          %v411 = vsel %vm390, %v409, %v410
          %v412 = vrot.slane %v372, 2
          %v413 = vrot.slane %v373, 2
          %v414 = vsel %vm390, %v412, %v413
          %v423 = vadd.f32 %v345, %v393
          %v424 = vadd.f32 %v346, %v396
          %v425 = vadd.f32 %v347, %v399
          %v426 = vadd.f32 %v348, %v402
          %v427 = vadd.f32 %v349, %v405
          %v428 = vadd.f32 %v350, %v408
          %v429 = vadd.f32 %v351, %v411
          %v430 = vadd.f32 %v352, %v414
          %v431 = vld [vmem:[%s213 + $0x3] sm:$0x1]
          %v432 = vlaneseq
          %v433 = vshrl.u32 %v432, 7
          %v434 = vsub.s32 0, %v433
          %v435 = vrot.slane %v431, %v434
          %v436 = vmul.f32 %v435, %v236
          %v437 = vmul.f32 %v435, %v238
          %v438 = vmul.f32 %v435, %v240
          %v439 = vmul.f32 %v435, %v242
          %v440 = vmul.f32 %v435, %v244
          %v441 = vmul.f32 %v435, %v246
          %v442 = vmul.f32 %v435, %v248
          %v443 = vmul.f32 %v435, %v250
          %v444 = vadd.f32 %v423, %v436
          %v445 = vadd.f32 %v424, %v437
          %v446 = vadd.f32 %v425, %v438
          %v447 = vadd.f32 %v426, %v439
          %v448 = vadd.f32 %v427, %v440
          %v449 = vadd.f32 %v428, %v441
          %v450 = vadd.f32 %v429, %v442
          %v451 = vadd.f32 %v430, %v443
          %v452 = vld [vmem:[%s213 + $0x4] sm:$0x1]
          %v453 = vlaneseq
          %v454 = vshrl.u32 %v453, 7
          %v455 = vsub.s32 0, %v454
          %v456 = vrot.slane %v452, %v455
          %v457 = vmul.f32 %v456, %v236
          %v458 = vmul.f32 %v456, %v237
          %v459 = vmul.f32 %v456, %v238
          %v460 = vmul.f32 %v456, %v239
          %v461 = vmul.f32 %v456, %v240
          %v462 = vmul.f32 %v456, %v241
          %v463 = vmul.f32 %v456, %v242
          %v464 = vmul.f32 %v456, %v243
          %v465 = vmul.f32 %v456, %v244
          %v466 = vmul.f32 %v456, %v245
          %v467 = vmul.f32 %v456, %v246
          %v468 = vmul.f32 %v456, %v247
          %v469 = vmul.f32 %v456, %v248
          %v470 = vmul.f32 %v456, %v249
          %v471 = vmul.f32 %v456, %v250
          %v472 = vmul.f32 %v456, %v251
          %v489 = vrot.slane %v457, 1
          %v490 = vrot.slane %v458, 1
          %v491 = vsel %vm312, %v489, %v490
          %v492 = vrot.slane %v459, 1
          %v493 = vrot.slane %v460, 1
          %v494 = vsel %vm312, %v492, %v493
          %v495 = vrot.slane %v461, 1
          %v496 = vrot.slane %v462, 1
          %v497 = vsel %vm312, %v495, %v496
          %v498 = vrot.slane %v463, 1
          %v499 = vrot.slane %v464, 1
          %v500 = vsel %vm312, %v498, %v499
          %v501 = vrot.slane %v465, 1
          %v502 = vrot.slane %v466, 1
          %v503 = vsel %vm312, %v501, %v502
          %v504 = vrot.slane %v467, 1
          %v505 = vrot.slane %v468, 1
          %v506 = vsel %vm312, %v504, %v505
          %v507 = vrot.slane %v469, 1
          %v508 = vrot.slane %v470, 1
          %v509 = vsel %vm312, %v507, %v508
          %v510 = vrot.slane %v471, 1
          %v511 = vrot.slane %v472, 1
          %v512 = vsel %vm312, %v510, %v511
          %v521 = vadd.f32 %v444, %v491
          %v522 = vadd.f32 %v445, %v494
          %v523 = vadd.f32 %v446, %v497
          %v524 = vadd.f32 %v447, %v500
          %v525 = vadd.f32 %v448, %v503
          %v526 = vadd.f32 %v449, %v506
          %v527 = vadd.f32 %v450, %v509
          %v528 = vadd.f32 %v451, %v512
          %v529 = vld [vmem:[%s213 + $0x5] sm:$0x1]
          %v530 = vlaneseq
          %v531 = vshrl.u32 %v530, 7
          %v532 = vsub.s32 0, %v531
          %v533 = vrot.slane %v529, %v532
          %v534 = vmul.f32 %v533, %v236
          %v535 = vmul.f32 %v533, %v237
          %v536 = vmul.f32 %v533, %v238
          %v537 = vmul.f32 %v533, %v239
          %v538 = vmul.f32 %v533, %v240
          %v539 = vmul.f32 %v533, %v241
          %v540 = vmul.f32 %v533, %v242
          %v541 = vmul.f32 %v533, %v243
          %v542 = vmul.f32 %v533, %v244
          %v543 = vmul.f32 %v533, %v245
          %v544 = vmul.f32 %v533, %v246
          %v545 = vmul.f32 %v533, %v247
          %v546 = vmul.f32 %v533, %v248
          %v547 = vmul.f32 %v533, %v249
          %v548 = vmul.f32 %v533, %v250
          %v549 = vmul.f32 %v533, %v251
          %v566 = vrot.slane %v534, 2
          %v567 = vrot.slane %v535, 2
          %v568 = vsel %vm390, %v566, %v567
          %v569 = vrot.slane %v536, 2
          %v570 = vrot.slane %v537, 2
          %v571 = vsel %vm390, %v569, %v570
          %v572 = vrot.slane %v538, 2
          %v573 = vrot.slane %v539, 2
          %v574 = vsel %vm390, %v572, %v573
          %v575 = vrot.slane %v540, 2
          %v576 = vrot.slane %v541, 2
          %v577 = vsel %vm390, %v575, %v576
          %v578 = vrot.slane %v542, 2
          %v579 = vrot.slane %v543, 2
          %v580 = vsel %vm390, %v578, %v579
          %v581 = vrot.slane %v544, 2
          %v582 = vrot.slane %v545, 2
          %v583 = vsel %vm390, %v581, %v582
          %v584 = vrot.slane %v546, 2
          %v585 = vrot.slane %v547, 2
          %v586 = vsel %vm390, %v584, %v585
          %v587 = vrot.slane %v548, 2
          %v588 = vrot.slane %v549, 2
          %v589 = vsel %vm390, %v587, %v588
          %v598 = vadd.f32 %v521, %v568
          %v599 = vadd.f32 %v522, %v571
          %v600 = vadd.f32 %v523, %v574
          %v601 = vadd.f32 %v524, %v577
          %v602 = vadd.f32 %v525, %v580
          %v603 = vadd.f32 %v526, %v583
          %v604 = vadd.f32 %v527, %v586
          %v605 = vadd.f32 %v528, %v589
          %v606 = vld [vmem:[%s213 + $0x6] sm:$0x1]
          %v607 = vlaneseq
          %v608 = vshrl.u32 %v607, 7
          %v609 = vsub.s32 0, %v608
          %v610 = vrot.slane %v606, %v609
          %v611 = vmul.f32 %v610, %v238
          %v612 = vmul.f32 %v610, %v240
          %v613 = vmul.f32 %v610, %v242
          %v614 = vmul.f32 %v610, %v244
          %v615 = vmul.f32 %v610, %v246
          %v616 = vmul.f32 %v610, %v248
          %v617 = vmul.f32 %v610, %v250
          %v618 = vmul.f32 %v610, %v252
          %v619 = vadd.f32 %v598, %v611
          %v620 = vadd.f32 %v599, %v612
          %v621 = vadd.f32 %v600, %v613
          %v622 = vadd.f32 %v601, %v614
          %v623 = vadd.f32 %v602, %v615
          %v624 = vadd.f32 %v603, %v616
          %v625 = vadd.f32 %v604, %v617
          %v626 = vadd.f32 %v605, %v618
          %v627 = vld [vmem:[%s213 + $0x7] sm:$0x1]
          %v628 = vlaneseq
          %v629 = vshrl.u32 %v628, 7
          %v630 = vsub.s32 0, %v629
          %v631 = vrot.slane %v627, %v630
          %v632 = vmul.f32 %v631, %v238
          %v633 = vmul.f32 %v631, %v239
          %v634 = vmul.f32 %v631, %v240
          %v635 = vmul.f32 %v631, %v241
          %v636 = vmul.f32 %v631, %v242
          %v637 = vmul.f32 %v631, %v243
          %v638 = vmul.f32 %v631, %v244
          %v639 = vmul.f32 %v631, %v245
          %v640 = vmul.f32 %v631, %v246
          %v641 = vmul.f32 %v631, %v247
          %v642 = vmul.f32 %v631, %v248
          %v643 = vmul.f32 %v631, %v249
          %v644 = vmul.f32 %v631, %v250
          %v645 = vmul.f32 %v631, %v251
          %v646 = vmul.f32 %v631, %v252
          %v647 = vmul.f32 %v631, %v253
          %v664 = vrot.slane %v632, 1
          %v665 = vrot.slane %v633, 1
          %v666 = vsel %vm312, %v664, %v665
          %v667 = vrot.slane %v634, 1
          %v668 = vrot.slane %v635, 1
          %v669 = vsel %vm312, %v667, %v668
          %v670 = vrot.slane %v636, 1
          %v671 = vrot.slane %v637, 1
          %v672 = vsel %vm312, %v670, %v671
          %v673 = vrot.slane %v638, 1
          %v674 = vrot.slane %v639, 1
          %v675 = vsel %vm312, %v673, %v674
          %v676 = vrot.slane %v640, 1
          %v677 = vrot.slane %v641, 1
          %v678 = vsel %vm312, %v676, %v677
          %v679 = vrot.slane %v642, 1
          %v680 = vrot.slane %v643, 1
          %v681 = vsel %vm312, %v679, %v680
          %v682 = vrot.slane %v644, 1
          %v683 = vrot.slane %v645, 1
          %v684 = vsel %vm312, %v682, %v683
          %v685 = vrot.slane %v646, 1
          %v686 = vrot.slane %v647, 1
          %v687 = vsel %vm312, %v685, %v686
          %v696 = vadd.f32 %v619, %v666
          %v697 = vadd.f32 %v620, %v669
          %v698 = vadd.f32 %v621, %v672
          %v699 = vadd.f32 %v622, %v675
          %v700 = vadd.f32 %v623, %v678
          %v701 = vadd.f32 %v624, %v681
          %v702 = vadd.f32 %v625, %v684
          %v703 = vadd.f32 %v626, %v687
          %v704 = vld [vmem:[%s213 + $0x8] sm:$0x1]
          %v705 = vlaneseq
          %v706 = vshrl.u32 %v705, 7
          %v707 = vsub.s32 0, %v706
          %v708 = vrot.slane %v704, %v707
          %v709 = vmul.f32 %v708, %v238
          %v710 = vmul.f32 %v708, %v239
          %v711 = vmul.f32 %v708, %v240
          %v712 = vmul.f32 %v708, %v241
          %v713 = vmul.f32 %v708, %v242
          %v714 = vmul.f32 %v708, %v243
          %v715 = vmul.f32 %v708, %v244
          %v716 = vmul.f32 %v708, %v245
          %v717 = vmul.f32 %v708, %v246
          %v718 = vmul.f32 %v708, %v247
          %v719 = vmul.f32 %v708, %v248
          %v720 = vmul.f32 %v708, %v249
          %v721 = vmul.f32 %v708, %v250
          %v722 = vmul.f32 %v708, %v251
          %v723 = vmul.f32 %v708, %v252
          %v724 = vmul.f32 %v708, %v253
          %v741 = vrot.slane %v709, 2
          %v742 = vrot.slane %v710, 2
          %v743 = vsel %vm390, %v741, %v742
          %v744 = vrot.slane %v711, 2
          %v745 = vrot.slane %v712, 2
          %v746 = vsel %vm390, %v744, %v745
          %v747 = vrot.slane %v713, 2
          %v748 = vrot.slane %v714, 2
          %v749 = vsel %vm390, %v747, %v748
          %v750 = vrot.slane %v715, 2
          %v751 = vrot.slane %v716, 2
          %v752 = vsel %vm390, %v750, %v751
          %v753 = vrot.slane %v717, 2
          %v754 = vrot.slane %v718, 2
          %v755 = vsel %vm390, %v753, %v754
          %v756 = vrot.slane %v719, 2
          %v757 = vrot.slane %v720, 2
          %v758 = vsel %vm390, %v756, %v757
          %v759 = vrot.slane %v721, 2
          %v760 = vrot.slane %v722, 2
          %v761 = vsel %vm390, %v759, %v760
          %v762 = vrot.slane %v723, 2
          %v763 = vrot.slane %v724, 2
          %v764 = vsel %vm390, %v762, %v763
          %v773 = vadd.f32 %v696, %v743
          %v774 = vadd.f32 %v697, %v746
          %v775 = vadd.f32 %v698, %v749
          %v776 = vadd.f32 %v699, %v752
          %v777 = vadd.f32 %v700, %v755
          %v778 = vadd.f32 %v701, %v758
          %v779 = vadd.f32 %v702, %v761
          %v780 = vadd.f32 %v703, %v764
          %s781 = sadd.s32 %s227, 1
          %s782 = smul.u32 %s781, 160
          %s783 = scalar_lea.vmem %s224, %s782
          %v784 = vld [vmem:[%s783] sm:$0xff]
          %v785 = vld [vmem:[%s783 + $0x8] sm:$0x3]
          %v786 = vld [vmem:[%s783 + $0x10] sm:$0xff]
          %v787 = vld [vmem:[%s783 + $0x18] sm:$0x3]
          %v788 = vld [vmem:[%s783 + $0x20] sm:$0xff]
          %v789 = vld [vmem:[%s783 + $0x28] sm:$0x3]
          %v790 = vld [vmem:[%s783 + $0x30] sm:$0xff]
          %v791 = vld [vmem:[%s783 + $0x38] sm:$0x3]
          %v792 = vld [vmem:[%s783 + $0x40] sm:$0xff]
          %v793 = vld [vmem:[%s783 + $0x48] sm:$0x3]
          %v794 = vld [vmem:[%s783 + $0x50] sm:$0xff]
          %v795 = vld [vmem:[%s783 + $0x58] sm:$0x3]
          %v796 = vld [vmem:[%s783 + $0x60] sm:$0xff]
          %v797 = vld [vmem:[%s783 + $0x68] sm:$0x3]
          %v798 = vld [vmem:[%s783 + $0x70] sm:$0xff]
          %v799 = vld [vmem:[%s783 + $0x78] sm:$0x3]
          %v800 = vld [vmem:[%s783 + $0x80] sm:$0xff]
          %v801 = vld [vmem:[%s783 + $0x88] sm:$0x3]
          %v802 = vld [vmem:[%s783 + $0x90] sm:$0xff]
          %v803 = vld [vmem:[%s783 + $0x98] sm:$0x3]
          %v804 = vld [vmem:[%s213 + $0x9] sm:$0x1]
          %v805 = vlaneseq
          %v806 = vshrl.u32 %v805, 7
          %v807 = vsub.s32 0, %v806
          %v808 = vrot.slane %v804, %v807
          %v809 = vmul.f32 %v808, %v784
          %v810 = vmul.f32 %v808, %v786
          %v811 = vmul.f32 %v808, %v788
          %v812 = vmul.f32 %v808, %v790
          %v813 = vmul.f32 %v808, %v792
          %v814 = vmul.f32 %v808, %v794
          %v815 = vmul.f32 %v808, %v796
          %v816 = vmul.f32 %v808, %v798
          %v817 = vadd.f32 %v773, %v809
          %v818 = vadd.f32 %v774, %v810
          %v819 = vadd.f32 %v775, %v811
          %v820 = vadd.f32 %v776, %v812
          %v821 = vadd.f32 %v777, %v813
          %v822 = vadd.f32 %v778, %v814
          %v823 = vadd.f32 %v779, %v815
          %v824 = vadd.f32 %v780, %v816
          %v825 = vld [vmem:[%s213 + $0xa] sm:$0x1]
          %v826 = vlaneseq
          %v827 = vshrl.u32 %v826, 7
          %v828 = vsub.s32 0, %v827
          %v829 = vrot.slane %v825, %v828
          %v830 = vmul.f32 %v829, %v784
          %v831 = vmul.f32 %v829, %v785
          %v832 = vmul.f32 %v829, %v786
          %v833 = vmul.f32 %v829, %v787
          %v834 = vmul.f32 %v829, %v788
          %v835 = vmul.f32 %v829, %v789
          %v836 = vmul.f32 %v829, %v790
          %v837 = vmul.f32 %v829, %v791
          %v838 = vmul.f32 %v829, %v792
          %v839 = vmul.f32 %v829, %v793
          %v840 = vmul.f32 %v829, %v794
          %v841 = vmul.f32 %v829, %v795
          %v842 = vmul.f32 %v829, %v796
          %v843 = vmul.f32 %v829, %v797
          %v844 = vmul.f32 %v829, %v798
          %v845 = vmul.f32 %v829, %v799
          %v862 = vrot.slane %v830, 1
          %v863 = vrot.slane %v831, 1
          %v864 = vsel %vm312, %v862, %v863
          %v865 = vrot.slane %v832, 1
          %v866 = vrot.slane %v833, 1
          %v867 = vsel %vm312, %v865, %v866
          %v868 = vrot.slane %v834, 1
          %v869 = vrot.slane %v835, 1
          %v870 = vsel %vm312, %v868, %v869
          %v871 = vrot.slane %v836, 1
          %v872 = vrot.slane %v837, 1
          %v873 = vsel %vm312, %v871, %v872
          %v874 = vrot.slane %v838, 1
          %v875 = vrot.slane %v839, 1
          %v876 = vsel %vm312, %v874, %v875
          %v877 = vrot.slane %v840, 1
          %v878 = vrot.slane %v841, 1
          %v879 = vsel %vm312, %v877, %v878
          %v880 = vrot.slane %v842, 1
          %v881 = vrot.slane %v843, 1
          %v882 = vsel %vm312, %v880, %v881
          %v883 = vrot.slane %v844, 1
          %v884 = vrot.slane %v845, 1
          %v885 = vsel %vm312, %v883, %v884
          %v894 = vadd.f32 %v817, %v864
          %v895 = vadd.f32 %v818, %v867
          %v896 = vadd.f32 %v819, %v870
          %v897 = vadd.f32 %v820, %v873
          %v898 = vadd.f32 %v821, %v876
          %v899 = vadd.f32 %v822, %v879
          %v900 = vadd.f32 %v823, %v882
          %v901 = vadd.f32 %v824, %v885
          %v902 = vld [vmem:[%s213 + $0xb] sm:$0x1]
          %v903 = vlaneseq
          %v904 = vshrl.u32 %v903, 7
          %v905 = vsub.s32 0, %v904
          %v906 = vrot.slane %v902, %v905
          %v907 = vmul.f32 %v906, %v784
          %v908 = vmul.f32 %v906, %v785
          %v909 = vmul.f32 %v906, %v786
          %v910 = vmul.f32 %v906, %v787
          %v911 = vmul.f32 %v906, %v788
          %v912 = vmul.f32 %v906, %v789
          %v913 = vmul.f32 %v906, %v790
          %v914 = vmul.f32 %v906, %v791
          %v915 = vmul.f32 %v906, %v792
          %v916 = vmul.f32 %v906, %v793
          %v917 = vmul.f32 %v906, %v794
          %v918 = vmul.f32 %v906, %v795
          %v919 = vmul.f32 %v906, %v796
          %v920 = vmul.f32 %v906, %v797
          %v921 = vmul.f32 %v906, %v798
          %v922 = vmul.f32 %v906, %v799
          %v939 = vrot.slane %v907, 2
          %v940 = vrot.slane %v908, 2
          %v941 = vsel %vm390, %v939, %v940
          %v942 = vrot.slane %v909, 2
          %v943 = vrot.slane %v910, 2
          %v944 = vsel %vm390, %v942, %v943
          %v945 = vrot.slane %v911, 2
          %v946 = vrot.slane %v912, 2
          %v947 = vsel %vm390, %v945, %v946
          %v948 = vrot.slane %v913, 2
          %v949 = vrot.slane %v914, 2
          %v950 = vsel %vm390, %v948, %v949
          %v951 = vrot.slane %v915, 2
          %v952 = vrot.slane %v916, 2
          %v953 = vsel %vm390, %v951, %v952
          %v954 = vrot.slane %v917, 2
          %v955 = vrot.slane %v918, 2
          %v956 = vsel %vm390, %v954, %v955
          %v957 = vrot.slane %v919, 2
          %v958 = vrot.slane %v920, 2
          %v959 = vsel %vm390, %v957, %v958
          %v960 = vrot.slane %v921, 2
          %v961 = vrot.slane %v922, 2
          %v962 = vsel %vm390, %v960, %v961
          %v971 = vadd.f32 %v894, %v941
          %v972 = vadd.f32 %v895, %v944
          %v973 = vadd.f32 %v896, %v947
          %v974 = vadd.f32 %v897, %v950
          %v975 = vadd.f32 %v898, %v953
          %v976 = vadd.f32 %v899, %v956
          %v977 = vadd.f32 %v900, %v959
          %v978 = vadd.f32 %v901, %v962
          %v979 = vld [vmem:[%s213 + $0xc] sm:$0x1]
          %v980 = vlaneseq
          %v981 = vshrl.u32 %v980, 7
          %v982 = vsub.s32 0, %v981
          %v983 = vrot.slane %v979, %v982
          %v984 = vmul.f32 %v983, %v786
          %v985 = vmul.f32 %v983, %v788
          %v986 = vmul.f32 %v983, %v790
          %v987 = vmul.f32 %v983, %v792
          %v988 = vmul.f32 %v983, %v794
          %v989 = vmul.f32 %v983, %v796
          %v990 = vmul.f32 %v983, %v798
          %v991 = vmul.f32 %v983, %v800
          %v992 = vadd.f32 %v971, %v984
          %v993 = vadd.f32 %v972, %v985
          %v994 = vadd.f32 %v973, %v986
          %v995 = vadd.f32 %v974, %v987
          %v996 = vadd.f32 %v975, %v988
          %v997 = vadd.f32 %v976, %v989
          %v998 = vadd.f32 %v977, %v990
          %v999 = vadd.f32 %v978, %v991
          %v1000 = vld [vmem:[%s213 + $0xd] sm:$0x1]
          %v1001 = vlaneseq
          %v1002 = vshrl.u32 %v1001, 7
          %v1003 = vsub.s32 0, %v1002
          %v1004 = vrot.slane %v1000, %v1003
          %v1005 = vmul.f32 %v1004, %v786
          %v1006 = vmul.f32 %v1004, %v787
          %v1007 = vmul.f32 %v1004, %v788
          %v1008 = vmul.f32 %v1004, %v789
          %v1009 = vmul.f32 %v1004, %v790
          %v1010 = vmul.f32 %v1004, %v791
          %v1011 = vmul.f32 %v1004, %v792
          %v1012 = vmul.f32 %v1004, %v793
          %v1013 = vmul.f32 %v1004, %v794
          %v1014 = vmul.f32 %v1004, %v795
          %v1015 = vmul.f32 %v1004, %v796
          %v1016 = vmul.f32 %v1004, %v797
          %v1017 = vmul.f32 %v1004, %v798
          %v1018 = vmul.f32 %v1004, %v799
          %v1019 = vmul.f32 %v1004, %v800
          %v1020 = vmul.f32 %v1004, %v801
          %v1037 = vrot.slane %v1005, 1
          %v1038 = vrot.slane %v1006, 1
          %v1039 = vsel %vm312, %v1037, %v1038
          %v1040 = vrot.slane %v1007, 1
          %v1041 = vrot.slane %v1008, 1
          %v1042 = vsel %vm312, %v1040, %v1041
          %v1043 = vrot.slane %v1009, 1
          %v1044 = vrot.slane %v1010, 1
          %v1045 = vsel %vm312, %v1043, %v1044
          %v1046 = vrot.slane %v1011, 1
          %v1047 = vrot.slane %v1012, 1
          %v1048 = vsel %vm312, %v1046, %v1047
          %v1049 = vrot.slane %v1013, 1
          %v1050 = vrot.slane %v1014, 1
          %v1051 = vsel %vm312, %v1049, %v1050
          %v1052 = vrot.slane %v1015, 1
          %v1053 = vrot.slane %v1016, 1
          %v1054 = vsel %vm312, %v1052, %v1053
          %v1055 = vrot.slane %v1017, 1
          %v1056 = vrot.slane %v1018, 1
          %v1057 = vsel %vm312, %v1055, %v1056
          %v1058 = vrot.slane %v1019, 1
          %v1059 = vrot.slane %v1020, 1
          %v1060 = vsel %vm312, %v1058, %v1059
          %v1069 = vadd.f32 %v992, %v1039
          %v1070 = vadd.f32 %v993, %v1042
          %v1071 = vadd.f32 %v994, %v1045
          %v1072 = vadd.f32 %v995, %v1048
          %v1073 = vadd.f32 %v996, %v1051
          %v1074 = vadd.f32 %v997, %v1054
          %v1075 = vadd.f32 %v998, %v1057
          %v1076 = vadd.f32 %v999, %v1060
          %v1077 = vld [vmem:[%s213 + $0xe] sm:$0x1]
          %v1078 = vlaneseq
          %v1079 = vshrl.u32 %v1078, 7
          %v1080 = vsub.s32 0, %v1079
          %v1081 = vrot.slane %v1077, %v1080
          %v1082 = vmul.f32 %v1081, %v786
          %v1083 = vmul.f32 %v1081, %v787
          %v1084 = vmul.f32 %v1081, %v788
          %v1085 = vmul.f32 %v1081, %v789
          %v1086 = vmul.f32 %v1081, %v790
          %v1087 = vmul.f32 %v1081, %v791
          %v1088 = vmul.f32 %v1081, %v792
          %v1089 = vmul.f32 %v1081, %v793
          %v1090 = vmul.f32 %v1081, %v794
          %v1091 = vmul.f32 %v1081, %v795
          %v1092 = vmul.f32 %v1081, %v796
          %v1093 = vmul.f32 %v1081, %v797
          %v1094 = vmul.f32 %v1081, %v798
          %v1095 = vmul.f32 %v1081, %v799
          %v1096 = vmul.f32 %v1081, %v800
          %v1097 = vmul.f32 %v1081, %v801
          %v1114 = vrot.slane %v1082, 2
          %v1115 = vrot.slane %v1083, 2
          %v1116 = vsel %vm390, %v1114, %v1115
          %v1117 = vrot.slane %v1084, 2
          %v1118 = vrot.slane %v1085, 2
          %v1119 = vsel %vm390, %v1117, %v1118
          %v1120 = vrot.slane %v1086, 2
          %v1121 = vrot.slane %v1087, 2
          %v1122 = vsel %vm390, %v1120, %v1121
          %v1123 = vrot.slane %v1088, 2
          %v1124 = vrot.slane %v1089, 2
          %v1125 = vsel %vm390, %v1123, %v1124
          %v1126 = vrot.slane %v1090, 2
          %v1127 = vrot.slane %v1091, 2
          %v1128 = vsel %vm390, %v1126, %v1127
          %v1129 = vrot.slane %v1092, 2
          %v1130 = vrot.slane %v1093, 2
          %v1131 = vsel %vm390, %v1129, %v1130
          %v1132 = vrot.slane %v1094, 2
          %v1133 = vrot.slane %v1095, 2
          %v1134 = vsel %vm390, %v1132, %v1133
          %v1135 = vrot.slane %v1096, 2
          %v1136 = vrot.slane %v1097, 2
          %v1137 = vsel %vm390, %v1135, %v1136
          %v1146 = vadd.f32 %v1069, %v1116
          %v1147 = vadd.f32 %v1070, %v1119
          %v1148 = vadd.f32 %v1071, %v1122
          %v1149 = vadd.f32 %v1072, %v1125
          %v1150 = vadd.f32 %v1073, %v1128
          %v1151 = vadd.f32 %v1074, %v1131
          %v1152 = vadd.f32 %v1075, %v1134
          %v1153 = vadd.f32 %v1076, %v1137
          %v1154 = vld [vmem:[%s213 + $0xf] sm:$0x1]
          %v1155 = vlaneseq
          %v1156 = vshrl.u32 %v1155, 7
          %v1157 = vsub.s32 0, %v1156
          %v1158 = vrot.slane %v1154, %v1157
          %v1159 = vmul.f32 %v1158, %v788
          %v1160 = vmul.f32 %v1158, %v790
          %v1161 = vmul.f32 %v1158, %v792
          %v1162 = vmul.f32 %v1158, %v794
          %v1163 = vmul.f32 %v1158, %v796
          %v1164 = vmul.f32 %v1158, %v798
          %v1165 = vmul.f32 %v1158, %v800
          %v1166 = vmul.f32 %v1158, %v802
          %v1167 = vadd.f32 %v1146, %v1159
          %v1168 = vadd.f32 %v1147, %v1160
          %v1169 = vadd.f32 %v1148, %v1161
          %v1170 = vadd.f32 %v1149, %v1162
          %v1171 = vadd.f32 %v1150, %v1163
          %v1172 = vadd.f32 %v1151, %v1164
          %v1173 = vadd.f32 %v1152, %v1165
          %v1174 = vadd.f32 %v1153, %v1166
          %v1175 = vld [vmem:[%s213 + $0x10] sm:$0x1]
          %v1176 = vlaneseq
          %v1177 = vshrl.u32 %v1176, 7
          %v1178 = vsub.s32 0, %v1177
          %v1179 = vrot.slane %v1175, %v1178
          %v1180 = vmul.f32 %v1179, %v788
          %v1181 = vmul.f32 %v1179, %v789
          %v1182 = vmul.f32 %v1179, %v790
          %v1183 = vmul.f32 %v1179, %v791
          %v1184 = vmul.f32 %v1179, %v792
          %v1185 = vmul.f32 %v1179, %v793
          %v1186 = vmul.f32 %v1179, %v794
          %v1187 = vmul.f32 %v1179, %v795
          %v1188 = vmul.f32 %v1179, %v796
          %v1189 = vmul.f32 %v1179, %v797
          %v1190 = vmul.f32 %v1179, %v798
          %v1191 = vmul.f32 %v1179, %v799
          %v1192 = vmul.f32 %v1179, %v800
          %v1193 = vmul.f32 %v1179, %v801
          %v1194 = vmul.f32 %v1179, %v802
          %v1195 = vmul.f32 %v1179, %v803
          %v1212 = vrot.slane %v1180, 1
          %v1213 = vrot.slane %v1181, 1
          %v1214 = vsel %vm312, %v1212, %v1213
          %v1215 = vrot.slane %v1182, 1
          %v1216 = vrot.slane %v1183, 1
          %v1217 = vsel %vm312, %v1215, %v1216
          %v1218 = vrot.slane %v1184, 1
          %v1219 = vrot.slane %v1185, 1
          %v1220 = vsel %vm312, %v1218, %v1219
          %v1221 = vrot.slane %v1186, 1
          %v1222 = vrot.slane %v1187, 1
          %v1223 = vsel %vm312, %v1221, %v1222
          %v1224 = vrot.slane %v1188, 1
          %v1225 = vrot.slane %v1189, 1
          %v1226 = vsel %vm312, %v1224, %v1225
          %v1227 = vrot.slane %v1190, 1
          %v1228 = vrot.slane %v1191, 1
          %v1229 = vsel %vm312, %v1227, %v1228
          %v1230 = vrot.slane %v1192, 1
          %v1231 = vrot.slane %v1193, 1
          %v1232 = vsel %vm312, %v1230, %v1231
          %v1233 = vrot.slane %v1194, 1
          %v1234 = vrot.slane %v1195, 1
          %v1235 = vsel %vm312, %v1233, %v1234
          %v1244 = vadd.f32 %v1167, %v1214
          %v1245 = vadd.f32 %v1168, %v1217
          %v1246 = vadd.f32 %v1169, %v1220
          %v1247 = vadd.f32 %v1170, %v1223
          %v1248 = vadd.f32 %v1171, %v1226
          %v1249 = vadd.f32 %v1172, %v1229
          %v1250 = vadd.f32 %v1173, %v1232
          %v1251 = vadd.f32 %v1174, %v1235
          %v1252 = vld [vmem:[%s213 + $0x11] sm:$0x1]
          %v1253 = vlaneseq
          %v1254 = vshrl.u32 %v1253, 7
          %v1255 = vsub.s32 0, %v1254
          %v1256 = vrot.slane %v1252, %v1255
          %v1257 = vmul.f32 %v1256, %v788
          %v1258 = vmul.f32 %v1256, %v789
          %v1259 = vmul.f32 %v1256, %v790
          %v1260 = vmul.f32 %v1256, %v791
          %v1261 = vmul.f32 %v1256, %v792
          %v1262 = vmul.f32 %v1256, %v793
          %v1263 = vmul.f32 %v1256, %v794
          %v1264 = vmul.f32 %v1256, %v795
          %v1265 = vmul.f32 %v1256, %v796
          %v1266 = vmul.f32 %v1256, %v797
          %v1267 = vmul.f32 %v1256, %v798
          %v1268 = vmul.f32 %v1256, %v799
          %v1269 = vmul.f32 %v1256, %v800
          %v1270 = vmul.f32 %v1256, %v801
          %v1271 = vmul.f32 %v1256, %v802
          %v1272 = vmul.f32 %v1256, %v803
          %v1289 = vrot.slane %v1257, 2
          %v1290 = vrot.slane %v1258, 2
          %v1291 = vsel %vm390, %v1289, %v1290
          %v1292 = vrot.slane %v1259, 2
          %v1293 = vrot.slane %v1260, 2
          %v1294 = vsel %vm390, %v1292, %v1293
          %v1295 = vrot.slane %v1261, 2
          %v1296 = vrot.slane %v1262, 2
          %v1297 = vsel %vm390, %v1295, %v1296
          %v1298 = vrot.slane %v1263, 2
          %v1299 = vrot.slane %v1264, 2
          %v1300 = vsel %vm390, %v1298, %v1299
          %v1301 = vrot.slane %v1265, 2
          %v1302 = vrot.slane %v1266, 2
          %v1303 = vsel %vm390, %v1301, %v1302
          %v1304 = vrot.slane %v1267, 2
          %v1305 = vrot.slane %v1268, 2
          %v1306 = vsel %vm390, %v1304, %v1305
          %v1307 = vrot.slane %v1269, 2
          %v1308 = vrot.slane %v1270, 2
          %v1309 = vsel %vm390, %v1307, %v1308
          %v1310 = vrot.slane %v1271, 2
          %v1311 = vrot.slane %v1272, 2
          %v1312 = vsel %vm390, %v1310, %v1311
          %v1321 = vadd.f32 %v1244, %v1291
          %v1322 = vadd.f32 %v1245, %v1294
          %v1323 = vadd.f32 %v1246, %v1297
          %v1324 = vadd.f32 %v1247, %v1300
          %v1325 = vadd.f32 %v1248, %v1303
          %v1326 = vadd.f32 %v1249, %v1306
          %v1327 = vadd.f32 %v1250, %v1309
          %v1328 = vadd.f32 %v1251, %v1312
          %s1329 = sadd.s32 %s227, 2
          %s1330 = smul.u32 %s1329, 160
          %s1331 = scalar_lea.vmem %s224, %s1330
          %v1332 = vld [vmem:[%s1331] sm:$0xff]
          %v1333 = vld [vmem:[%s1331 + $0x8] sm:$0x3]
          %v1334 = vld [vmem:[%s1331 + $0x10] sm:$0xff]
          %v1335 = vld [vmem:[%s1331 + $0x18] sm:$0x3]
          %v1336 = vld [vmem:[%s1331 + $0x20] sm:$0xff]
          %v1337 = vld [vmem:[%s1331 + $0x28] sm:$0x3]
          %v1338 = vld [vmem:[%s1331 + $0x30] sm:$0xff]
          %v1339 = vld [vmem:[%s1331 + $0x38] sm:$0x3]
          %v1340 = vld [vmem:[%s1331 + $0x40] sm:$0xff]
          %v1341 = vld [vmem:[%s1331 + $0x48] sm:$0x3]
          %v1342 = vld [vmem:[%s1331 + $0x50] sm:$0xff]
          %v1343 = vld [vmem:[%s1331 + $0x58] sm:$0x3]
          %v1344 = vld [vmem:[%s1331 + $0x60] sm:$0xff]
          %v1345 = vld [vmem:[%s1331 + $0x68] sm:$0x3]
          %v1346 = vld [vmem:[%s1331 + $0x70] sm:$0xff]
          %v1347 = vld [vmem:[%s1331 + $0x78] sm:$0x3]
          %v1348 = vld [vmem:[%s1331 + $0x80] sm:$0xff]
          %v1349 = vld [vmem:[%s1331 + $0x88] sm:$0x3]
          %v1350 = vld [vmem:[%s1331 + $0x90] sm:$0xff]
          %v1351 = vld [vmem:[%s1331 + $0x98] sm:$0x3]
          %v1352 = vld [vmem:[%s213 + $0x12] sm:$0x1]
          %v1353 = vlaneseq
          %v1354 = vshrl.u32 %v1353, 7
          %v1355 = vsub.s32 0, %v1354
          %v1356 = vrot.slane %v1352, %v1355
          %v1357 = vmul.f32 %v1356, %v1332
          %v1358 = vmul.f32 %v1356, %v1334
          %v1359 = vmul.f32 %v1356, %v1336
          %v1360 = vmul.f32 %v1356, %v1338
          %v1361 = vmul.f32 %v1356, %v1340
          %v1362 = vmul.f32 %v1356, %v1342
          %v1363 = vmul.f32 %v1356, %v1344
          %v1364 = vmul.f32 %v1356, %v1346
          %v1365 = vadd.f32 %v1321, %v1357
          %v1366 = vadd.f32 %v1322, %v1358
          %v1367 = vadd.f32 %v1323, %v1359
          %v1368 = vadd.f32 %v1324, %v1360
          %v1369 = vadd.f32 %v1325, %v1361
          %v1370 = vadd.f32 %v1326, %v1362
          %v1371 = vadd.f32 %v1327, %v1363
          %v1372 = vadd.f32 %v1328, %v1364
          %v1373 = vld [vmem:[%s213 + $0x13] sm:$0x1]
          %v1374 = vlaneseq
          %v1375 = vshrl.u32 %v1374, 7
          %v1376 = vsub.s32 0, %v1375
          %v1377 = vrot.slane %v1373, %v1376
          %v1378 = vmul.f32 %v1377, %v1332
          %v1379 = vmul.f32 %v1377, %v1333
          %v1380 = vmul.f32 %v1377, %v1334
          %v1381 = vmul.f32 %v1377, %v1335
          %v1382 = vmul.f32 %v1377, %v1336
          %v1383 = vmul.f32 %v1377, %v1337
          %v1384 = vmul.f32 %v1377, %v1338
          %v1385 = vmul.f32 %v1377, %v1339
          %v1386 = vmul.f32 %v1377, %v1340
          %v1387 = vmul.f32 %v1377, %v1341
          %v1388 = vmul.f32 %v1377, %v1342
          %v1389 = vmul.f32 %v1377, %v1343
          %v1390 = vmul.f32 %v1377, %v1344
          %v1391 = vmul.f32 %v1377, %v1345
          %v1392 = vmul.f32 %v1377, %v1346
          %v1393 = vmul.f32 %v1377, %v1347
          %v1410 = vrot.slane %v1378, 1
          %v1411 = vrot.slane %v1379, 1
          %v1412 = vsel %vm312, %v1410, %v1411
          %v1413 = vrot.slane %v1380, 1
          %v1414 = vrot.slane %v1381, 1
          %v1415 = vsel %vm312, %v1413, %v1414
          %v1416 = vrot.slane %v1382, 1
          %v1417 = vrot.slane %v1383, 1
          %v1418 = vsel %vm312, %v1416, %v1417
          %v1419 = vrot.slane %v1384, 1
          %v1420 = vrot.slane %v1385, 1
          %v1421 = vsel %vm312, %v1419, %v1420
          %v1422 = vrot.slane %v1386, 1
          %v1423 = vrot.slane %v1387, 1
          %v1424 = vsel %vm312, %v1422, %v1423
          %v1425 = vrot.slane %v1388, 1
          %v1426 = vrot.slane %v1389, 1
          %v1427 = vsel %vm312, %v1425, %v1426
          %v1428 = vrot.slane %v1390, 1
          %v1429 = vrot.slane %v1391, 1
          %v1430 = vsel %vm312, %v1428, %v1429
          %v1431 = vrot.slane %v1392, 1
          %v1432 = vrot.slane %v1393, 1
          %v1433 = vsel %vm312, %v1431, %v1432
          %v1442 = vadd.f32 %v1365, %v1412
          %v1443 = vadd.f32 %v1366, %v1415
          %v1444 = vadd.f32 %v1367, %v1418
          %v1445 = vadd.f32 %v1368, %v1421
          %v1446 = vadd.f32 %v1369, %v1424
          %v1447 = vadd.f32 %v1370, %v1427
          %v1448 = vadd.f32 %v1371, %v1430
          %v1449 = vadd.f32 %v1372, %v1433
          %v1450 = vld [vmem:[%s213 + $0x14] sm:$0x1]
          %v1451 = vlaneseq
          %v1452 = vshrl.u32 %v1451, 7
          %v1453 = vsub.s32 0, %v1452
          %v1454 = vrot.slane %v1450, %v1453
          %v1455 = vmul.f32 %v1454, %v1332
          %v1456 = vmul.f32 %v1454, %v1333
          %v1457 = vmul.f32 %v1454, %v1334
          %v1458 = vmul.f32 %v1454, %v1335
          %v1459 = vmul.f32 %v1454, %v1336
          %v1460 = vmul.f32 %v1454, %v1337
          %v1461 = vmul.f32 %v1454, %v1338
          %v1462 = vmul.f32 %v1454, %v1339
          %v1463 = vmul.f32 %v1454, %v1340
          %v1464 = vmul.f32 %v1454, %v1341
          %v1465 = vmul.f32 %v1454, %v1342
          %v1466 = vmul.f32 %v1454, %v1343
          %v1467 = vmul.f32 %v1454, %v1344
          %v1468 = vmul.f32 %v1454, %v1345
          %v1469 = vmul.f32 %v1454, %v1346
          %v1470 = vmul.f32 %v1454, %v1347
          %v1487 = vrot.slane %v1455, 2
          %v1488 = vrot.slane %v1456, 2
          %v1489 = vsel %vm390, %v1487, %v1488
          %v1490 = vrot.slane %v1457, 2
          %v1491 = vrot.slane %v1458, 2
          %v1492 = vsel %vm390, %v1490, %v1491
          %v1493 = vrot.slane %v1459, 2
          %v1494 = vrot.slane %v1460, 2
          %v1495 = vsel %vm390, %v1493, %v1494
          %v1496 = vrot.slane %v1461, 2
          %v1497 = vrot.slane %v1462, 2
          %v1498 = vsel %vm390, %v1496, %v1497
          %v1499 = vrot.slane %v1463, 2
          %v1500 = vrot.slane %v1464, 2
          %v1501 = vsel %vm390, %v1499, %v1500
          %v1502 = vrot.slane %v1465, 2
          %v1503 = vrot.slane %v1466, 2
          %v1504 = vsel %vm390, %v1502, %v1503
          %v1505 = vrot.slane %v1467, 2
          %v1506 = vrot.slane %v1468, 2
          %v1507 = vsel %vm390, %v1505, %v1506
          %v1508 = vrot.slane %v1469, 2
          %v1509 = vrot.slane %v1470, 2
          %v1510 = vsel %vm390, %v1508, %v1509
          %v1519 = vadd.f32 %v1442, %v1489
          %v1520 = vadd.f32 %v1443, %v1492
          %v1521 = vadd.f32 %v1444, %v1495
          %v1522 = vadd.f32 %v1445, %v1498
          %v1523 = vadd.f32 %v1446, %v1501
          %v1524 = vadd.f32 %v1447, %v1504
          %v1525 = vadd.f32 %v1448, %v1507
          %v1526 = vadd.f32 %v1449, %v1510
          %v1527 = vld [vmem:[%s213 + $0x15] sm:$0x1]
          %v1528 = vlaneseq
          %v1529 = vshrl.u32 %v1528, 7
          %v1530 = vsub.s32 0, %v1529
          %v1531 = vrot.slane %v1527, %v1530
          %v1532 = vmul.f32 %v1531, %v1334
          %v1533 = vmul.f32 %v1531, %v1336
          %v1534 = vmul.f32 %v1531, %v1338
          %v1535 = vmul.f32 %v1531, %v1340
          %v1536 = vmul.f32 %v1531, %v1342
          %v1537 = vmul.f32 %v1531, %v1344
          %v1538 = vmul.f32 %v1531, %v1346
          %v1539 = vmul.f32 %v1531, %v1348
          %v1540 = vadd.f32 %v1519, %v1532
          %v1541 = vadd.f32 %v1520, %v1533
          %v1542 = vadd.f32 %v1521, %v1534
          %v1543 = vadd.f32 %v1522, %v1535
          %v1544 = vadd.f32 %v1523, %v1536
          %v1545 = vadd.f32 %v1524, %v1537
          %v1546 = vadd.f32 %v1525, %v1538
          %v1547 = vadd.f32 %v1526, %v1539
          %v1548 = vld [vmem:[%s213 + $0x16] sm:$0x1]
          %v1549 = vlaneseq
          %v1550 = vshrl.u32 %v1549, 7
          %v1551 = vsub.s32 0, %v1550
          %v1552 = vrot.slane %v1548, %v1551
          %v1553 = vmul.f32 %v1552, %v1334
          %v1554 = vmul.f32 %v1552, %v1335
          %v1555 = vmul.f32 %v1552, %v1336
          %v1556 = vmul.f32 %v1552, %v1337
          %v1557 = vmul.f32 %v1552, %v1338
          %v1558 = vmul.f32 %v1552, %v1339
          %v1559 = vmul.f32 %v1552, %v1340
          %v1560 = vmul.f32 %v1552, %v1341
          %v1561 = vmul.f32 %v1552, %v1342
          %v1562 = vmul.f32 %v1552, %v1343
          %v1563 = vmul.f32 %v1552, %v1344
          %v1564 = vmul.f32 %v1552, %v1345
          %v1565 = vmul.f32 %v1552, %v1346
          %v1566 = vmul.f32 %v1552, %v1347
          %v1567 = vmul.f32 %v1552, %v1348
          %v1568 = vmul.f32 %v1552, %v1349
          %v1585 = vrot.slane %v1553, 1
          %v1586 = vrot.slane %v1554, 1
          %v1587 = vsel %vm312, %v1585, %v1586
          %v1588 = vrot.slane %v1555, 1
          %v1589 = vrot.slane %v1556, 1
          %v1590 = vsel %vm312, %v1588, %v1589
          %v1591 = vrot.slane %v1557, 1
          %v1592 = vrot.slane %v1558, 1
          %v1593 = vsel %vm312, %v1591, %v1592
          %v1594 = vrot.slane %v1559, 1
          %v1595 = vrot.slane %v1560, 1
          %v1596 = vsel %vm312, %v1594, %v1595
          %v1597 = vrot.slane %v1561, 1
          %v1598 = vrot.slane %v1562, 1
          %v1599 = vsel %vm312, %v1597, %v1598
          %v1600 = vrot.slane %v1563, 1
          %v1601 = vrot.slane %v1564, 1
          %v1602 = vsel %vm312, %v1600, %v1601
          %v1603 = vrot.slane %v1565, 1
          %v1604 = vrot.slane %v1566, 1
          %v1605 = vsel %vm312, %v1603, %v1604
          %v1606 = vrot.slane %v1567, 1
          %v1607 = vrot.slane %v1568, 1
          %v1608 = vsel %vm312, %v1606, %v1607
          %v1617 = vadd.f32 %v1540, %v1587
          %v1618 = vadd.f32 %v1541, %v1590
          %v1619 = vadd.f32 %v1542, %v1593
          %v1620 = vadd.f32 %v1543, %v1596
          %v1621 = vadd.f32 %v1544, %v1599
          %v1622 = vadd.f32 %v1545, %v1602
          %v1623 = vadd.f32 %v1546, %v1605
          %v1624 = vadd.f32 %v1547, %v1608
          %v1625 = vld [vmem:[%s213 + $0x17] sm:$0x1]
          %v1626 = vlaneseq
          %v1627 = vshrl.u32 %v1626, 7
          %v1628 = vsub.s32 0, %v1627
          %v1629 = vrot.slane %v1625, %v1628
          %v1630 = vmul.f32 %v1629, %v1334
          %v1631 = vmul.f32 %v1629, %v1335
          %v1632 = vmul.f32 %v1629, %v1336
          %v1633 = vmul.f32 %v1629, %v1337
          %v1634 = vmul.f32 %v1629, %v1338
          %v1635 = vmul.f32 %v1629, %v1339
          %v1636 = vmul.f32 %v1629, %v1340
          %v1637 = vmul.f32 %v1629, %v1341
          %v1638 = vmul.f32 %v1629, %v1342
          %v1639 = vmul.f32 %v1629, %v1343
          %v1640 = vmul.f32 %v1629, %v1344
          %v1641 = vmul.f32 %v1629, %v1345
          %v1642 = vmul.f32 %v1629, %v1346
          %v1643 = vmul.f32 %v1629, %v1347
          %v1644 = vmul.f32 %v1629, %v1348
          %v1645 = vmul.f32 %v1629, %v1349
          %v1662 = vrot.slane %v1630, 2
          %v1663 = vrot.slane %v1631, 2
          %v1664 = vsel %vm390, %v1662, %v1663
          %v1665 = vrot.slane %v1632, 2
          %v1666 = vrot.slane %v1633, 2
          %v1667 = vsel %vm390, %v1665, %v1666
          %v1668 = vrot.slane %v1634, 2
          %v1669 = vrot.slane %v1635, 2
          %v1670 = vsel %vm390, %v1668, %v1669
          %v1671 = vrot.slane %v1636, 2
          %v1672 = vrot.slane %v1637, 2
          %v1673 = vsel %vm390, %v1671, %v1672
          %v1674 = vrot.slane %v1638, 2
          %v1675 = vrot.slane %v1639, 2
          %v1676 = vsel %vm390, %v1674, %v1675
          %v1677 = vrot.slane %v1640, 2
          %v1678 = vrot.slane %v1641, 2
          %v1679 = vsel %vm390, %v1677, %v1678
          %v1680 = vrot.slane %v1642, 2
          %v1681 = vrot.slane %v1643, 2
          %v1682 = vsel %vm390, %v1680, %v1681
          %v1683 = vrot.slane %v1644, 2
          %v1684 = vrot.slane %v1645, 2
          %v1685 = vsel %vm390, %v1683, %v1684
          %v1694 = vadd.f32 %v1617, %v1664
          %v1695 = vadd.f32 %v1618, %v1667
          %v1696 = vadd.f32 %v1619, %v1670
          %v1697 = vadd.f32 %v1620, %v1673
          %v1698 = vadd.f32 %v1621, %v1676
          %v1699 = vadd.f32 %v1622, %v1679
          %v1700 = vadd.f32 %v1623, %v1682
          %v1701 = vadd.f32 %v1624, %v1685
          %v1702 = vld [vmem:[%s213 + $0x18] sm:$0x1]
          %v1703 = vlaneseq
          %v1704 = vshrl.u32 %v1703, 7
          %v1705 = vsub.s32 0, %v1704
          %v1706 = vrot.slane %v1702, %v1705
          %v1707 = vmul.f32 %v1706, %v1336
          %v1708 = vmul.f32 %v1706, %v1338
          %v1709 = vmul.f32 %v1706, %v1340
          %v1710 = vmul.f32 %v1706, %v1342
          %v1711 = vmul.f32 %v1706, %v1344
          %v1712 = vmul.f32 %v1706, %v1346
          %v1713 = vmul.f32 %v1706, %v1348
          %v1714 = vmul.f32 %v1706, %v1350
          %v1715 = vadd.f32 %v1694, %v1707
          %v1716 = vadd.f32 %v1695, %v1708
          %v1717 = vadd.f32 %v1696, %v1709
          %v1718 = vadd.f32 %v1697, %v1710
          %v1719 = vadd.f32 %v1698, %v1711
          %v1720 = vadd.f32 %v1699, %v1712
          %v1721 = vadd.f32 %v1700, %v1713
          %v1722 = vadd.f32 %v1701, %v1714
          %v1723 = vld [vmem:[%s213 + $0x19] sm:$0x1]
          %v1724 = vlaneseq
          %v1725 = vshrl.u32 %v1724, 7
          %v1726 = vsub.s32 0, %v1725
          %v1727 = vrot.slane %v1723, %v1726
          %v1728 = vmul.f32 %v1727, %v1336
          %v1729 = vmul.f32 %v1727, %v1337
          %v1730 = vmul.f32 %v1727, %v1338
          %v1731 = vmul.f32 %v1727, %v1339
          %v1732 = vmul.f32 %v1727, %v1340
          %v1733 = vmul.f32 %v1727, %v1341
          %v1734 = vmul.f32 %v1727, %v1342
          %v1735 = vmul.f32 %v1727, %v1343
          %v1736 = vmul.f32 %v1727, %v1344
          %v1737 = vmul.f32 %v1727, %v1345
          %v1738 = vmul.f32 %v1727, %v1346
          %v1739 = vmul.f32 %v1727, %v1347
          %v1740 = vmul.f32 %v1727, %v1348
          %v1741 = vmul.f32 %v1727, %v1349
          %v1742 = vmul.f32 %v1727, %v1350
          %v1743 = vmul.f32 %v1727, %v1351
          %v1760 = vrot.slane %v1728, 1
          %v1761 = vrot.slane %v1729, 1
          %v1762 = vsel %vm312, %v1760, %v1761
          %v1763 = vrot.slane %v1730, 1
          %v1764 = vrot.slane %v1731, 1
          %v1765 = vsel %vm312, %v1763, %v1764
          %v1766 = vrot.slane %v1732, 1
          %v1767 = vrot.slane %v1733, 1
          %v1768 = vsel %vm312, %v1766, %v1767
          %v1769 = vrot.slane %v1734, 1
          %v1770 = vrot.slane %v1735, 1
          %v1771 = vsel %vm312, %v1769, %v1770
          %v1772 = vrot.slane %v1736, 1
          %v1773 = vrot.slane %v1737, 1
          %v1774 = vsel %vm312, %v1772, %v1773
          %v1775 = vrot.slane %v1738, 1
          %v1776 = vrot.slane %v1739, 1
          %v1777 = vsel %vm312, %v1775, %v1776
          %v1778 = vrot.slane %v1740, 1
          %v1779 = vrot.slane %v1741, 1
          %v1780 = vsel %vm312, %v1778, %v1779
          %v1781 = vrot.slane %v1742, 1
          %v1782 = vrot.slane %v1743, 1
          %v1783 = vsel %vm312, %v1781, %v1782
          %v1792 = vadd.f32 %v1715, %v1762
          %v1793 = vadd.f32 %v1716, %v1765
          %v1794 = vadd.f32 %v1717, %v1768
          %v1795 = vadd.f32 %v1718, %v1771
          %v1796 = vadd.f32 %v1719, %v1774
          %v1797 = vadd.f32 %v1720, %v1777
          %v1798 = vadd.f32 %v1721, %v1780
          %v1799 = vadd.f32 %v1722, %v1783
          %v1800 = vld [vmem:[%s213 + $0x1a] sm:$0x1]
          %v1801 = vlaneseq
          %v1802 = vshrl.u32 %v1801, 7
          %v1803 = vsub.s32 0, %v1802
          %v1804 = vrot.slane %v1800, %v1803
          %v1805 = vmul.f32 %v1804, %v1336
          %v1806 = vmul.f32 %v1804, %v1337
          %v1807 = vmul.f32 %v1804, %v1338
          %v1808 = vmul.f32 %v1804, %v1339
          %v1809 = vmul.f32 %v1804, %v1340
          %v1810 = vmul.f32 %v1804, %v1341
          %v1811 = vmul.f32 %v1804, %v1342
          %v1812 = vmul.f32 %v1804, %v1343
          %v1813 = vmul.f32 %v1804, %v1344
          %v1814 = vmul.f32 %v1804, %v1345
          %v1815 = vmul.f32 %v1804, %v1346
          %v1816 = vmul.f32 %v1804, %v1347
          %v1817 = vmul.f32 %v1804, %v1348
          %v1818 = vmul.f32 %v1804, %v1349
          %v1819 = vmul.f32 %v1804, %v1350
          %v1820 = vmul.f32 %v1804, %v1351
          %v1837 = vrot.slane %v1805, 2
          %v1838 = vrot.slane %v1806, 2
          %v1839 = vsel %vm390, %v1837, %v1838
          %v1840 = vrot.slane %v1807, 2
          %v1841 = vrot.slane %v1808, 2
          %v1842 = vsel %vm390, %v1840, %v1841
          %v1843 = vrot.slane %v1809, 2
          %v1844 = vrot.slane %v1810, 2
          %v1845 = vsel %vm390, %v1843, %v1844
          %v1846 = vrot.slane %v1811, 2
          %v1847 = vrot.slane %v1812, 2
          %v1848 = vsel %vm390, %v1846, %v1847
          %v1849 = vrot.slane %v1813, 2
          %v1850 = vrot.slane %v1814, 2
          %v1851 = vsel %vm390, %v1849, %v1850
          %v1852 = vrot.slane %v1815, 2
          %v1853 = vrot.slane %v1816, 2
          %v1854 = vsel %vm390, %v1852, %v1853
          %v1855 = vrot.slane %v1817, 2
          %v1856 = vrot.slane %v1818, 2
          %v1857 = vsel %vm390, %v1855, %v1856
          %v1858 = vrot.slane %v1819, 2
          %v1859 = vrot.slane %v1820, 2
          %v1860 = vsel %vm390, %v1858, %v1859
          %v1869 = vadd.f32 %v1792, %v1839
          %v1870 = vadd.f32 %v1793, %v1842
          %v1871 = vadd.f32 %v1794, %v1845
          %v1872 = vadd.f32 %v1795, %v1848
          %v1873 = vadd.f32 %v1796, %v1851
          %v1874 = vadd.f32 %v1797, %v1854
          %v1875 = vadd.f32 %v1798, %v1857
          %v1876 = vadd.f32 %v1799, %v1860
          %v1878 = vlaneseq
          %v1879 = vshrl.u32 %v1878, 7
          %v1880 = vsub.s32 0, %v1879
          %v1881 = vrot.slane %v225, %v1880
          %v1883 = vadd.f32 %v1869, %v1881
          %v1884 = vadd.f32 %v1870, %v1881
          %v1885 = vadd.f32 %v1871, %v1881
          %v1886 = vadd.f32 %v1872, %v1881
          %v1887 = vadd.f32 %v1873, %v1881
          %v1888 = vadd.f32 %v1874, %v1881
          %v1889 = vadd.f32 %v1875, %v1881
          %v1890 = vadd.f32 %v1876, %v1881
          %s1891 = smul.u32 %s227, 64
          %s1892 = scalar_lea.vmem %s209, %s1891 [#allocation2]
          %1893 = vst [vmem:[%s1892] sm:$0xff] %v1883
          %1894 = vst [vmem:[%s1892 + $0x8] sm:$0xff] %v1884
          %1895 = vst [vmem:[%s1892 + $0x10] sm:$0xff] %v1885
          %1896 = vst [vmem:[%s1892 + $0x18] sm:$0xff] %v1886
          %1897 = vst [vmem:[%s1892 + $0x20] sm:$0xff] %v1887
          %1898 = vst [vmem:[%s1892 + $0x28] sm:$0xff] %v1888
          %1899 = vst [vmem:[%s1892 + $0x30] sm:$0xff] %v1889
          %1900 = vst [vmem:[%s1892 + $0x38] sm:$0xff] %v1890
        $region37: #{tpu_custom_call.1} parent=31 // loop_footer
          %s231 = sadd.s32 1, %s227
        $region38: #{tpu_custom_call.1} parent=31 // loop_footer_branch
          %226 = sbr.rel target = $region34
        $region39: #{tpu_custom_call.1} parent=31 // loop_exit
          _
        %s1901 = sand.u32 %s119, 1
        %s1902 = scalar_lea.sflag [#allocation3], %s1901
        %s1903 = sand.u32 %s119, 1
        %s1904 = smul.addr %s1903, 512
        %s1905 = scalar_lea.vmem [#allocation2], %s1904
        // Predicated region
        $region40: #{tpu_custom_call.1} parent=31 // pred_check
          %p1906 = pneg %p129
        $region41: #{tpu_custom_call.1} parent=31 // pred_check_branch
          %1908 = sbr.rel (%p1906) target = $region43
        $region42: #{tpu_custom_call.1} parent=31 // pred_region
          %s1910 = ssub.s32 8192, 8192
          %1911 = vsyncadd %s1902, %s1910
          %s1912 = smul.addr %s21, 64
          %s1913 = sadd.s32 %s22, %s1912
          %s1914 = smul.addr %s1913, 128
          %s1915 = scalar_lea.hbm %s3, %s1914
          %s1916 = sshll.u32 %s1905, 4
          %s1917 = int_to_ptr.vmem [resolvable:$true] %s1916
          %1922 = dma.vmem_to_hbm [thread:$0]  %s1917, 8192, %s1915, %s1902, 128, 128, 8
        $region43: #{tpu_custom_call.1} parent=31 // pred_fallthru
          _
      $region32: #{tpu_custom_call.1} parent=5 // pred_fallthru
        _
      %p1923 = scmp.le.s32.totalorder 2, %s12
      // Predicated region
      $region44: #{tpu_custom_call.1} parent=5 // pred_check
        %p1924 = pneg %p1923
      $region45: #{tpu_custom_call.1} parent=5 // pred_check_branch
        %1926 = sbr.rel (%p1924) target = $region47
      $region46: #{tpu_custom_call.1} parent=5 // pred_region
        %s1927 = ssub.s32 %s12, 2
        // Predicated region
        $region48: #{tpu_custom_call.1} parent=46 // pred_check
          %p1928 = pneg %p135
        $region49: #{tpu_custom_call.1} parent=46 // pred_check_branch
          %1930 = sbr.rel (%p1928) target = $region51
        $region50: #{tpu_custom_call.1} parent=46 // pred_region
          %s1931 = sand.u32 %s120, 1
          %s1932 = scalar_lea.sflag [#allocation3], %s1931
          %s1933 = sand.u32 %s120, 1
          %s1934 = smul.addr %s1933, 512
          %s1935 = scalar_lea.vmem [#allocation2], %s1934
          %1936 = dma.done %s1932, 8192
        $region51: #{tpu_custom_call.1} parent=46 // pred_fallthru
          _
      $region47: #{tpu_custom_call.1} parent=5 // pred_fallthru
        _
    $region6: #{tpu_custom_call.1} parent=1 // loop_footer
      %s16 = sadd.s32 1, %s12
    $region7: #{tpu_custom_call.1} parent=1 // loop_footer_branch
      %11 = sbr.rel target = $region3
    $region8: #{tpu_custom_call.1} parent=1 // loop_exit
      _
    %1937 = vsyncpa [#allocation3], 1
    %s1938 = scalar_lea.sflag [#allocation3], 1
    %1939 = vsyncpa %s1938, 1

</llo_original>
